<compile_context>
chip_gen: v6e
topology: v6e:2x2x1
jax: 0.10.0
libtpu: 0.0.40
codegen_flags: <defaults>
</compile_context>

<pallas_src>
import functools

import jax
import jax.numpy as jnp
import numpy as np
from jax import lax
from jax.experimental import pallas as pl
from jax.experimental.pallas import tpu as pltpu

ZP = 128           # single lane-dense tile holding [hidden | output | pad]
OP = 128           # padded output-logit width (unmasked lane-dense stores)
NEG = -1.0e30      # log-softmax mask value for padded output lanes


def rnn_seq_kernel(zbase_ref, h0_ref, wh_ref, wo_ref, bo_ref,
                   out_ref, hid_ref, *, ts, t_total, needs_mask):
    blk = pl.program_id(0)

    @pl.when(blk == 0)
    def _init():
        # Carried packed state z lives in the resident hidden-output block.
        hid_ref[...] = h0_ref[...]

    def step(s, z):
        # Recurrent dot on the critical path: only rows 0:H of W_h are nonzero,
        # so z @ W_h == h_{t-1} @ W_h_fused with no lane slicing.
        z_new = zbase_ref[s] + jnp.dot(z, wh_ref[...],
                                       preferred_element_type=jnp.float32)
        if needs_mask:
            # Freeze the carry for padded tail timesteps (outputs are sliced off).
            z_new = jnp.where(blk * ts + s < t_total, z_new, z)

        # Output path (off the h_t -> h_{t+1} chain): o2o dot + log_softmax.
        # Padded logit lanes carry a -1e30 bias so exp underflows to exactly 0.
        o = (jnp.dot(z_new, wo_ref[...], preferred_element_type=jnp.float32)
             + bo_ref[...])
        m = jnp.max(o, axis=1, keepdims=True)
        lse = m + jnp.log(jnp.sum(jnp.exp(o - m), axis=1, keepdims=True))
        out_ref[s] = o - lse

        # dropout(0.1): identity in eval mode.
        return z_new

    hid_ref[...] = lax.fori_loop(0, ts, step, hid_ref[...], unroll=min(ts, 8))


def init_params(key, n_categories, input_size, hidden_size, output_size):
    """Deterministic PyTorch-Linear-style init (uniform +/- 1/sqrt(fan_in)).

    Weights stored transposed as [in_features, out_features].
    """
    C = n_categories + input_size + hidden_size
    C2 = hidden_size + output_size
    ks = jax.random.split(key, 6)

    def u(k, shape, fan_in):
        bound = 1.0 / np.sqrt(fan_in)
        return jax.random.uniform(k, shape, jnp.float32, -bound, bound)

    return {
        "w_i2h": u(ks[0], (C, hidden_size), C),
        "b_i2h": u(ks[1], (hidden_size,), C),
        "w_i2o": u(ks[2], (C, output_size), C),
        "b_i2o": u(ks[3], (output_size,), C),
        "w_o2o": u(ks[4], (C2, output_size), C2),
        "b_o2o": u(ks[5], (output_size,), C2),
    }


def pack_params(p, n_categories, input_size, hidden_size, output_size):
    """Fuse i2h/i2o into ONE 128-lane tile, split rows by (category|input|hidden),
    and pack o2o so it acts on the packed z directly (concat-free)."""
    H, O = hidden_size, output_size
    assert H + O <= ZP and O <= OP, "packed layout requires hidden+output <= 128"
    C = n_categories + input_size + H

    w_fused = jnp.zeros((C, ZP), jnp.float32)
    w_fused = w_fused.at[:, :H].set(p["w_i2h"])
    w_fused = w_fused.at[:, H:H + O].set(p["w_i2o"])

    w_cat = w_fused[:n_categories]                                    # [n_cat, ZP]
    w_x = w_fused[n_categories:n_categories + input_size]             # [in,    ZP]
    # Recurrent weight acts on the full packed z; only hidden rows are nonzero.
    w_h = jnp.zeros((ZP, ZP), jnp.float32).at[:H].set(
        w_fused[n_categories + input_size:])                          # [ZP,    ZP]

    b_z = jnp.zeros((1, ZP), jnp.float32)
    b_z = b_z.at[0, :H].set(p["b_i2h"]).at[0, H:H + O].set(p["b_i2o"])

    # o2o(cat(hidden, output)) == z @ W_o_packed + b_o_packed
    w_o = jnp.zeros((ZP, OP), jnp.float32)
    w_o = w_o.at[:H, :O].set(p["w_o2o"][:H])                          # hidden rows
    w_o = w_o.at[H:H + O, :O].set(p["w_o2o"][H:])                     # output rows

    b_o = jnp.full((1, OP), NEG, jnp.float32).at[0, :O].set(p["b_o2o"])

    return {"w_cat": w_cat, "w_x": w_x, "w_h": w_h, "b_z": b_z,
            "w_o": w_o, "b_o": b_o}


@functools.partial(jax.jit, static_argnames=("hidden_size", "output_size"))
def rnn_forward(category, x_seq, h0, packed, *, hidden_size, output_size):
    """Run the whole sequence in one time-tiled pallas_call.

    category: [B, n_cat] (fixed across the sequence), x_seq: [T, B, input_size],
    h0: [B, hidden_size].
    Returns (log_probs [T, B, output_size], final hidden [B, hidden_size]).
    """
    T, B, input_size = x_seq.shape
    n_cat = category.shape[1]
    B_pad = max(8, -(-B // 8) * 8)                 # sublane-dense batch

    TS = min(T, 64)                                # timesteps per grid step
    T_pad = -(-T // TS) * TS
    needs_mask = T_pad != T

    cat_p = jnp.zeros((B_pad, n_cat), jnp.float32).at[:B].set(category)
    x_p = jnp.zeros((T_pad, B_pad, input_size), jnp.float32).at[:T, :B].set(x_seq)
    h0_p = jnp.zeros((B_pad, ZP), jnp.float32).at[:B, :hidden_size].set(h0)

    # Once-per-sequence input-side precompute (plain XLA matmuls, not per-step):
    # zbase[t] = cat @ W_cat + b_z + x_t @ W_x   -> lane-dense [T_pad, B_pad, ZP]
    zbase = (jnp.einsum("tbi,iz->tbz", x_p, packed["w_x"])
             + (cat_p @ packed["w_cat"] + packed["b_z"])[None])

    flops = int(2 * T_pad * B_pad * (ZP * ZP + ZP * OP))
    transcendentals = int(T_pad * B_pad * (OP + 1))
    bytes_accessed = int(4 * (zbase.size + h0_p.size
                              + packed["w_h"].size + packed["w_o"].size
                              + packed["b_o"].size
                              + T_pad * B_pad * OP + B_pad * ZP))

    kernel = functools.partial(rnn_seq_kernel, ts=TS, t_total=T,
                               needs_mask=needs_mask)

    grid_spec = pltpu.PrefetchScalarGridSpec(
        num_scalar_prefetch=0,
        grid=(T_pad // TS,),
        in_specs=[
            pl.BlockSpec((TS, B_pad, ZP), lambda i: (i, 0, 0)),   # zbase tile
            pl.BlockSpec((B_pad, ZP), lambda i: (0, 0)),          # h0   (resident)
            pl.BlockSpec((ZP, ZP), lambda i: (0, 0)),             # W_h  (resident)
            pl.BlockSpec((ZP, OP), lambda i: (0, 0)),             # W_o  (resident)
            pl.BlockSpec((1, OP), lambda i: (0, 0)),              # b_o  (resident)
        ],
        out_specs=(
            pl.BlockSpec((TS, B_pad, OP), lambda i: (i, 0, 0)),   # log-probs tile
            pl.BlockSpec((B_pad, ZP), lambda i: (0, 0)),          # carried / final z
        ),
    )

    out_p, hid_p = pl.pallas_call(
        kernel,
        out_shape=(
            jax.ShapeDtypeStruct((T_pad, B_pad, OP), jnp.float32),
            jax.ShapeDtypeStruct((B_pad, ZP), jnp.float32),
        ),
        grid_spec=grid_spec,
        compiler_params=pltpu.CompilerParams(
            dimension_semantics=("arbitrary",)),                   # time is sequential
        cost_estimate=pl.CostEstimate(
            flops=flops, transcendentals=transcendentals,
            bytes_accessed=bytes_accessed),
    )(zbase, h0_p, packed["w_h"], packed["w_o"], packed["b_o"])

    return out_p[:T, :B, :output_size], hid_p[:B, :hidden_size]


# ---------------- pure-JAX reference (mirrors the PyTorch forward, per step) ----------------
def rnn_step_ref(category, x, hidden, p):
    xc = jnp.concatenate([category, x, hidden], axis=1)
    h = xc @ p["w_i2h"] + p["b_i2h"]
    o = xc @ p["w_i2o"] + p["b_i2o"]
    oc = jnp.concatenate([h, o], axis=1)
    o = oc @ p["w_o2o"] + p["b_o2o"]
    return jax.nn.log_softmax(o, axis=1), h


def rnn_forward_ref(category, x_seq, h0, p):
    outs, h = [], h0
    for t in range(x_seq.shape[0]):
        o, h = rnn_step_ref(category, x_seq[t], h, p)
        outs.append(o)
    return jnp.stack(outs), h


if __name__ == "__main__":
    B, T = 2, 8
    n_categories, input_size, hidden_size, output_size = 4, 8, 32, 8

    key = jax.random.PRNGKey(0)
    kp, kc, kx = jax.random.split(key, 3)
    params = init_params(kp, n_categories, input_size, hidden_size, output_size)
    packed = pack_params(params, n_categories, input_size, hidden_size, output_size)

    category = jax.random.normal(kc, (B, n_categories), jnp.float32)
    x_seq = jax.random.normal(kx, (T, B, input_size), jnp.float32)
    h0 = jnp.zeros((B, hidden_size), jnp.float32)     # initHidden()

    out, hid = rnn_forward(category, x_seq, h0, packed,
                           hidden_size=hidden_size, output_size=output_size)
    out = jax.block_until_ready(out)
    hid = jax.block_until_ready(hid)

    out_ref, hid_ref = rnn_forward_ref(category, x_seq, h0, params)
    np.testing.assert_allclose(np.asarray(out), np.asarray(out_ref), rtol=1e-5, atol=1e-5)
    np.testing.assert_allclose(np.asarray(hid), np.asarray(hid_ref), rtol=1e-5, atol=1e-5)

    print("KERNEL_OK")
</pallas_src>

<mosaic_0001>
module attributes {stable_mosaic.version = 11 : i64} {
  func.func @rnn_seq_kernel(%arg0: i32, %arg1: memref<8x8x128xf32, #tpu.memory_space<vmem>>, %arg2: memref<8x128xf32, #tpu.memory_space<vmem>>, %arg3: memref<128x128xf32, #tpu.memory_space<vmem>>, %arg4: memref<128x128xf32, #tpu.memory_space<vmem>>, %arg5: memref<1x128xf32, #tpu.memory_space<vmem>>, %arg6: memref<8x8x128xf32, #tpu.memory_space<vmem>>, %arg7: memref<8x128xf32, #tpu.memory_space<vmem>>) attributes {dimension_semantics = [#tpu.dimension_semantics<arbitrary>], iteration_bounds = array<i64: 1>, scalar_prefetch = 0 : i64, scratch_operands = 0 : i64, tpu.core_type = #tpu.core_type<tc>, window_params = [{transform_indices = @transform_0, window_bounds = array<i64: 8, 8, 128>}, {pipeline_mode = #tpu.pipeline_mode<synchronous>, transform_indices = @transform_1, window_bounds = array<i64: 8, 128>}, {pipeline_mode = #tpu.pipeline_mode<synchronous>, transform_indices = @transform_2, window_bounds = array<i64: 128, 128>}, {pipeline_mode = #tpu.pipeline_mode<synchronous>, transform_indices = @transform_3, window_bounds = array<i64: 128, 128>}, {pipeline_mode = #tpu.pipeline_mode<synchronous>, transform_indices = @transform_4, window_bounds = array<i64: 1, 128>}, {transform_indices = @transform_5, window_bounds = array<i64: 8, 8, 128>}, {pipeline_mode = #tpu.pipeline_mode<synchronous>, transform_indices = @transform_6, window_bounds = array<i64: 8, 128>}]} {
    %c0_i32 = arith.constant 0 : i32
    %0 = arith.cmpi eq, %arg0, %c0_i32 : i32
    %1 = arith.extui %0 : i1 to i32
    %c0_i32_0 = arith.constant 0 : i32
    %2 = arith.cmpi ne, %1, %c0_i32_0 : i32
    scf.if %2 {
      %c0_116 = arith.constant 0 : index
      %c0_117 = arith.constant 0 : index
      %213 = vector.load %arg2[%c0_116, %c0_117] : memref<8x128xf32, #tpu.memory_space<vmem>>, vector<8x128xf32>
      %c0_118 = arith.constant 0 : index
      %c0_119 = arith.constant 0 : index
      %214 = vector.load %arg7[%c0_118, %c0_119] : memref<8x128xf32, #tpu.memory_space<vmem>>, vector<8x128xf32>
      tpu.vector_store %arg7[%c0_118, %c0_119], %213 {strides = array<i32>} : memref<8x128xf32, #tpu.memory_space<vmem>>, vector<8x128xf32>,
    } else {
    }
    %c0 = arith.constant 0 : index
    %c0_1 = arith.constant 0 : index
    %3 = vector.load %arg7[%c0, %c0_1] : memref<8x128xf32, #tpu.memory_space<vmem>>, vector<8x128xf32>
    %c0_i32_2 = arith.constant 0 : i32
    %4 = arith.index_cast %c0_i32_2 : i32 to index
    %c0_3 = arith.constant 0 : index
    %c0_4 = arith.constant 0 : index
    %5 = vector.load %arg1[%4, %c0_3, %c0_4] : memref<8x8x128xf32, #tpu.memory_space<vmem>>, vector<1x8x128xf32>
    %6 = vector.shape_cast %5 : vector<1x8x128xf32> to vector<8x128xf32>
    %c0_5 = arith.constant 0 : index
    %c0_6 = arith.constant 0 : index
    %7 = vector.load %arg3[%c0_5, %c0_6] : memref<128x128xf32, #tpu.memory_space<vmem>>, vector<128x128xf32>
    %cst = arith.constant dense<0.000000e+00> : vector<8x128xf32>
    %8 = tpu.matmul %3, %7, %cst {dimension_numbers = #tpu.dot_dimension_numbers<[1], [0], [0], [1], [0, 0, 1, 1], [], []>} : vector<8x128xf32>, vector<128x128xf32>, vector<8x128xf32> -> vector<8x128xf32>
    %9 = arith.addf %6, %8 : vector<8x128xf32>
    %c0_7 = arith.constant 0 : index
    %c0_8 = arith.constant 0 : index
    %10 = vector.load %arg4[%c0_7, %c0_8] : memref<128x128xf32, #tpu.memory_space<vmem>>, vector<128x128xf32>
    %cst_9 = arith.constant dense<0.000000e+00> : vector<8x128xf32>
    %11 = tpu.matmul %9, %10, %cst_9 {dimension_numbers = #tpu.dot_dimension_numbers<[1], [0], [0], [1], [0, 0, 1, 1], [], []>} : vector<8x128xf32>, vector<128x128xf32>, vector<8x128xf32> -> vector<8x128xf32>
    %c0_10 = arith.constant 0 : index
    %c0_11 = arith.constant 0 : index
    %12 = vector.load %arg5[%c0_10, %c0_11] : memref<1x128xf32, #tpu.memory_space<vmem>>, vector<1x128xf32>
    %13 = vector.broadcast %12 : vector<1x128xf32> to vector<8x128xf32>
    %14 = arith.addf %11, %13 : vector<8x128xf32>
    %cst_12 = arith.constant dense<0xFF800000> : vector<8xf32>
    %15 = vector.multi_reduction <maximumf>, %14, %cst_12 [1] : vector<8x128xf32> to vector<8xf32>
    %16 = vector.shape_cast %15 : vector<8xf32> to vector<8x1xf32>
    %17 = vector.broadcast %16 : vector<8x1xf32> to vector<8x128xf32>
    %18 = arith.subf %14, %17 : vector<8x128xf32>
    %19 = math.exp %18 : vector<8x128xf32>
    %cst_13 = arith.constant dense<0.000000e+00> : vector<8xf32>
    %20 = vector.multi_reduction <add>, %19, %cst_13 [1] : vector<8x128xf32> to vector<8xf32>
    %21 = vector.shape_cast %20 : vector<8xf32> to vector<8x1xf32>
    %22 = math.log %21 : vector<8x1xf32>
    %23 = arith.addf %16, %22 : vector<8x1xf32>
    %24 = vector.broadcast %23 : vector<8x1xf32> to vector<8x128xf32>
    %25 = arith.subf %14, %24 : vector<8x128xf32>
    %26 = arith.index_cast %c0_i32_2 : i32 to index
    %c0_14 = arith.constant 0 : index
    %c0_15 = arith.constant 0 : index
    %27 = vector.load %arg6[%26, %c0_14, %c0_15] : memref<8x8x128xf32, #tpu.memory_space<vmem>>, vector<1x8x128xf32>
    %28 = vector.shape_cast %27 : vector<1x8x128xf32> to vector<8x128xf32>
    %29 = vector.shape_cast %25 : vector<8x128xf32> to vector<1x8x128xf32>
    tpu.vector_store %arg6[%26, %c0_14, %c0_15], %29 {strides = array<i32>} : memref<8x8x128xf32, #tpu.memory_space<vmem>>, vector<1x8x128xf32>,
    %c1_i32 = arith.constant 1 : i32
    %30 = arith.index_cast %c1_i32 : i32 to index
    %c0_16 = arith.constant 0 : index
    %c0_17 = arith.constant 0 : index
    %31 = vector.load %arg1[%30, %c0_16, %c0_17] : memref<8x8x128xf32, #tpu.memory_space<vmem>>, vector<1x8x128xf32>
    %32 = vector.shape_cast %31 : vector<1x8x128xf32> to vector<8x128xf32>
    %c0_18 = arith.constant 0 : index
    %c0_19 = arith.constant 0 : index
    %33 = vector.load %arg3[%c0_18, %c0_19] : memref<128x128xf32, #tpu.memory_space<vmem>>, vector<128x128xf32>
    %cst_20 = arith.constant dense<0.000000e+00> : vector<8x128xf32>
    %34 = tpu.matmul %9, %33, %cst_20 {dimension_numbers = #tpu.dot_dimension_numbers<[1], [0], [0], [1], [0, 0, 1, 1], [], []>} : vector<8x128xf32>, vector<128x128xf32>, vector<8x128xf32> -> vector<8x128xf32>
    %35 = arith.addf %32, %34 : vector<8x128xf32>
    %c0_21 = arith.constant 0 : index
    %c0_22 = arith.constant 0 : index
    %36 = vector.load %arg4[%c0_21, %c0_22] : memref<128x128xf32, #tpu.memory_space<vmem>>, vector<128x128xf32>
    %cst_23 = arith.constant dense<0.000000e+00> : vector<8x128xf32>
    %37 = tpu.matmul %35, %36, %cst_23 {dimension_numbers = #tpu.dot_dimension_numbers<[1], [0], [0], [1], [0, 0, 1, 1], [], []>} : vector<8x128xf32>, vector<128x128xf32>, vector<8x128xf32> -> vector<8x128xf32>
    %c0_24 = arith.constant 0 : index
    %c0_25 = arith.constant 0 : index
    %38 = vector.load %arg5[%c0_24, %c0_25] : memref<1x128xf32, #tpu.memory_space<vmem>>, vector<1x128xf32>
    %39 = vector.broadcast %38 : vector<1x128xf32> to vector<8x128xf32>
    %40 = arith.addf %37, %39 : vector<8x128xf32>
    %cst_26 = arith.constant dense<0xFF800000> : vector<8xf32>
    %41 = vector.multi_reduction <maximumf>, %40, %cst_26 [1] : vector<8x128xf32> to vector<8xf32>
    %42 = vector.shape_cast %41 : vector<8xf32> to vector<8x1xf32>
    %43 = vector.broadcast %42 : vector<8x1xf32> to vector<8x128xf32>
    %44 = arith.subf %40, %43 : vector<8x128xf32>
    %45 = math.exp %44 : vector<8x128xf32>
    %cst_27 = arith.constant dense<0.000000e+00> : vector<8xf32>
    %46 = vector.multi_reduction <add>, %45, %cst_27 [1] : vector<8x128xf32> to vector<8xf32>
    %47 = vector.shape_cast %46 : vector<8xf32> to vector<8x1xf32>
    %48 = math.log %47 : vector<8x1xf32>
    %49 = arith.addf %42, %48 : vector<8x1xf32>
    %50 = vector.broadcast %49 : vector<8x1xf32> to vector<8x128xf32>
    %51 = arith.subf %40, %50 : vector<8x128xf32>
    %52 = arith.index_cast %c1_i32 : i32 to index
    %c0_28 = arith.constant 0 : index
    %c0_29 = arith.constant 0 : index
    %53 = vector.load %arg6[%52, %c0_28, %c0_29] : memref<8x8x128xf32, #tpu.memory_space<vmem>>, vector<1x8x128xf32>
    %54 = vector.shape_cast %53 : vector<1x8x128xf32> to vector<8x128xf32>
    %55 = vector.shape_cast %51 : vector<8x128xf32> to vector<1x8x128xf32>
    tpu.vector_store %arg6[%52, %c0_28, %c0_29], %55 {strides = array<i32>} : memref<8x8x128xf32, #tpu.memory_space<vmem>>, vector<1x8x128xf32>,
    %c2_i32 = arith.constant 2 : i32
    %56 = arith.index_cast %c2_i32 : i32 to index
    %c0_30 = arith.constant 0 : index
    %c0_31 = arith.constant 0 : index
    %57 = vector.load %arg1[%56, %c0_30, %c0_31] : memref<8x8x128xf32, #tpu.memory_space<vmem>>, vector<1x8x128xf32>
    %58 = vector.shape_cast %57 : vector<1x8x128xf32> to vector<8x128xf32>
    %c0_32 = arith.constant 0 : index
    %c0_33 = arith.constant 0 : index
    %59 = vector.load %arg3[%c0_32, %c0_33] : memref<128x128xf32, #tpu.memory_space<vmem>>, vector<128x128xf32>
    %cst_34 = arith.constant dense<0.000000e+00> : vector<8x128xf32>
    %60 = tpu.matmul %35, %59, %cst_34 {dimension_numbers = #tpu.dot_dimension_numbers<[1], [0], [0], [1], [0, 0, 1, 1], [], []>} : vector<8x128xf32>, vector<128x128xf32>, vector<8x128xf32> -> vector<8x128xf32>
    %61 = arith.addf %58, %60 : vector<8x128xf32>
    %c0_35 = arith.constant 0 : index
    %c0_36 = arith.constant 0 : index
    %62 = vector.load %arg4[%c0_35, %c0_36] : memref<128x128xf32, #tpu.memory_space<vmem>>, vector<128x128xf32>
    %cst_37 = arith.constant dense<0.000000e+00> : vector<8x128xf32>
    %63 = tpu.matmul %61, %62, %cst_37 {dimension_numbers = #tpu.dot_dimension_numbers<[1], [0], [0], [1], [0, 0, 1, 1], [], []>} : vector<8x128xf32>, vector<128x128xf32>, vector<8x128xf32> -> vector<8x128xf32>
    %c0_38 = arith.constant 0 : index
    %c0_39 = arith.constant 0 : index
    %64 = vector.load %arg5[%c0_38, %c0_39] : memref<1x128xf32, #tpu.memory_space<vmem>>, vector<1x128xf32>
    %65 = vector.broadcast %64 : vector<1x128xf32> to vector<8x128xf32>
    %66 = arith.addf %63, %65 : vector<8x128xf32>
    %cst_40 = arith.constant dense<0xFF800000> : vector<8xf32>
    %67 = vector.multi_reduction <maximumf>, %66, %cst_40 [1] : vector<8x128xf32> to vector<8xf32>
    %68 = vector.shape_cast %67 : vector<8xf32> to vector<8x1xf32>
    %69 = vector.broadcast %68 : vector<8x1xf32> to vector<8x128xf32>
    %70 = arith.subf %66, %69 : vector<8x128xf32>
    %71 = math.exp %70 : vector<8x128xf32>
    %cst_41 = arith.constant dense<0.000000e+00> : vector<8xf32>
    %72 = vector.multi_reduction <add>, %71, %cst_41 [1] : vector<8x128xf32> to vector<8xf32>
    %73 = vector.shape_cast %72 : vector<8xf32> to vector<8x1xf32>
    %74 = math.log %73 : vector<8x1xf32>
    %75 = arith.addf %68, %74 : vector<8x1xf32>
    %76 = vector.broadcast %75 : vector<8x1xf32> to vector<8x128xf32>
    %77 = arith.subf %66, %76 : vector<8x128xf32>
    %78 = arith.index_cast %c2_i32 : i32 to index
    %c0_42 = arith.constant 0 : index
    %c0_43 = arith.constant 0 : index
    %79 = vector.load %arg6[%78, %c0_42, %c0_43] : memref<8x8x128xf32, #tpu.memory_space<vmem>>, vector<1x8x128xf32>
    %80 = vector.shape_cast %79 : vector<1x8x128xf32> to vector<8x128xf32>
    %81 = vector.shape_cast %77 : vector<8x128xf32> to vector<1x8x128xf32>
    tpu.vector_store %arg6[%78, %c0_42, %c0_43], %81 {strides = array<i32>} : memref<8x8x128xf32, #tpu.memory_space<vmem>>, vector<1x8x128xf32>,
    %c3_i32 = arith.constant 3 : i32
    %82 = arith.index_cast %c3_i32 : i32 to index
    %c0_44 = arith.constant 0 : index
    %c0_45 = arith.constant 0 : index
    %83 = vector.load %arg1[%82, %c0_44, %c0_45] : memref<8x8x128xf32, #tpu.memory_space<vmem>>, vector<1x8x128xf32>
    %84 = vector.shape_cast %83 : vector<1x8x128xf32> to vector<8x128xf32>
    %c0_46 = arith.constant 0 : index
    %c0_47 = arith.constant 0 : index
    %85 = vector.load %arg3[%c0_46, %c0_47] : memref<128x128xf32, #tpu.memory_space<vmem>>, vector<128x128xf32>
    %cst_48 = arith.constant dense<0.000000e+00> : vector<8x128xf32>
    %86 = tpu.matmul %61, %85, %cst_48 {dimension_numbers = #tpu.dot_dimension_numbers<[1], [0], [0], [1], [0, 0, 1, 1], [], []>} : vector<8x128xf32>, vector<128x128xf32>, vector<8x128xf32> -> vector<8x128xf32>
    %87 = arith.addf %84, %86 : vector<8x128xf32>
    %c0_49 = arith.constant 0 : index
    %c0_50 = arith.constant 0 : index
    %88 = vector.load %arg4[%c0_49, %c0_50] : memref<128x128xf32, #tpu.memory_space<vmem>>, vector<128x128xf32>
    %cst_51 = arith.constant dense<0.000000e+00> : vector<8x128xf32>
    %89 = tpu.matmul %87, %88, %cst_51 {dimension_numbers = #tpu.dot_dimension_numbers<[1], [0], [0], [1], [0, 0, 1, 1], [], []>} : vector<8x128xf32>, vector<128x128xf32>, vector<8x128xf32> -> vector<8x128xf32>
    %c0_52 = arith.constant 0 : index
    %c0_53 = arith.constant 0 : index
    %90 = vector.load %arg5[%c0_52, %c0_53] : memref<1x128xf32, #tpu.memory_space<vmem>>, vector<1x128xf32>
    %91 = vector.broadcast %90 : vector<1x128xf32> to vector<8x128xf32>
    %92 = arith.addf %89, %91 : vector<8x128xf32>
    %cst_54 = arith.constant dense<0xFF800000> : vector<8xf32>
    %93 = vector.multi_reduction <maximumf>, %92, %cst_54 [1] : vector<8x128xf32> to vector<8xf32>
    %94 = vector.shape_cast %93 : vector<8xf32> to vector<8x1xf32>
    %95 = vector.broadcast %94 : vector<8x1xf32> to vector<8x128xf32>
    %96 = arith.subf %92, %95 : vector<8x128xf32>
    %97 = math.exp %96 : vector<8x128xf32>
    %cst_55 = arith.constant dense<0.000000e+00> : vector<8xf32>
    %98 = vector.multi_reduction <add>, %97, %cst_55 [1] : vector<8x128xf32> to vector<8xf32>
    %99 = vector.shape_cast %98 : vector<8xf32> to vector<8x1xf32>
    %100 = math.log %99 : vector<8x1xf32>
    %101 = arith.addf %94, %100 : vector<8x1xf32>
    %102 = vector.broadcast %101 : vector<8x1xf32> to vector<8x128xf32>
    %103 = arith.subf %92, %102 : vector<8x128xf32>
    %104 = arith.index_cast %c3_i32 : i32 to index
    %c0_56 = arith.constant 0 : index
    %c0_57 = arith.constant 0 : index
    %105 = vector.load %arg6[%104, %c0_56, %c0_57] : memref<8x8x128xf32, #tpu.memory_space<vmem>>, vector<1x8x128xf32>
    %106 = vector.shape_cast %105 : vector<1x8x128xf32> to vector<8x128xf32>
    %107 = vector.shape_cast %103 : vector<8x128xf32> to vector<1x8x128xf32>
    tpu.vector_store %arg6[%104, %c0_56, %c0_57], %107 {strides = array<i32>} : memref<8x8x128xf32, #tpu.memory_space<vmem>>, vector<1x8x128xf32>,
    %c4_i32 = arith.constant 4 : i32
    %108 = arith.index_cast %c4_i32 : i32 to index
    %c0_58 = arith.constant 0 : index
    %c0_59 = arith.constant 0 : index
    %109 = vector.load %arg1[%108, %c0_58, %c0_59] : memref<8x8x128xf32, #tpu.memory_space<vmem>>, vector<1x8x128xf32>
    %110 = vector.shape_cast %109 : vector<1x8x128xf32> to vector<8x128xf32>
    %c0_60 = arith.constant 0 : index
    %c0_61 = arith.constant 0 : index
    %111 = vector.load %arg3[%c0_60, %c0_61] : memref<128x128xf32, #tpu.memory_space<vmem>>, vector<128x128xf32>
    %cst_62 = arith.constant dense<0.000000e+00> : vector<8x128xf32>
    %112 = tpu.matmul %87, %111, %cst_62 {dimension_numbers = #tpu.dot_dimension_numbers<[1], [0], [0], [1], [0, 0, 1, 1], [], []>} : vector<8x128xf32>, vector<128x128xf32>, vector<8x128xf32> -> vector<8x128xf32>
    %113 = arith.addf %110, %112 : vector<8x128xf32>
    %c0_63 = arith.constant 0 : index
    %c0_64 = arith.constant 0 : index
    %114 = vector.load %arg4[%c0_63, %c0_64] : memref<128x128xf32, #tpu.memory_space<vmem>>, vector<128x128xf32>
    %cst_65 = arith.constant dense<0.000000e+00> : vector<8x128xf32>
    %115 = tpu.matmul %113, %114, %cst_65 {dimension_numbers = #tpu.dot_dimension_numbers<[1], [0], [0], [1], [0, 0, 1, 1], [], []>} : vector<8x128xf32>, vector<128x128xf32>, vector<8x128xf32> -> vector<8x128xf32>
    %c0_66 = arith.constant 0 : index
    %c0_67 = arith.constant 0 : index
    %116 = vector.load %arg5[%c0_66, %c0_67] : memref<1x128xf32, #tpu.memory_space<vmem>>, vector<1x128xf32>
    %117 = vector.broadcast %116 : vector<1x128xf32> to vector<8x128xf32>
    %118 = arith.addf %115, %117 : vector<8x128xf32>
    %cst_68 = arith.constant dense<0xFF800000> : vector<8xf32>
    %119 = vector.multi_reduction <maximumf>, %118, %cst_68 [1] : vector<8x128xf32> to vector<8xf32>
    %120 = vector.shape_cast %119 : vector<8xf32> to vector<8x1xf32>
    %121 = vector.broadcast %120 : vector<8x1xf32> to vector<8x128xf32>
    %122 = arith.subf %118, %121 : vector<8x128xf32>
    %123 = math.exp %122 : vector<8x128xf32>
    %cst_69 = arith.constant dense<0.000000e+00> : vector<8xf32>
    %124 = vector.multi_reduction <add>, %123, %cst_69 [1] : vector<8x128xf32> to vector<8xf32>
    %125 = vector.shape_cast %124 : vector<8xf32> to vector<8x1xf32>
    %126 = math.log %125 : vector<8x1xf32>
    %127 = arith.addf %120, %126 : vector<8x1xf32>
    %128 = vector.broadcast %127 : vector<8x1xf32> to vector<8x128xf32>
    %129 = arith.subf %118, %128 : vector<8x128xf32>
    %130 = arith.index_cast %c4_i32 : i32 to index
    %c0_70 = arith.constant 0 : index
    %c0_71 = arith.constant 0 : index
    %131 = vector.load %arg6[%130, %c0_70, %c0_71] : memref<8x8x128xf32, #tpu.memory_space<vmem>>, vector<1x8x128xf32>
    %132 = vector.shape_cast %131 : vector<1x8x128xf32> to vector<8x128xf32>
    %133 = vector.shape_cast %129 : vector<8x128xf32> to vector<1x8x128xf32>
    tpu.vector_store %arg6[%130, %c0_70, %c0_71], %133 {strides = array<i32>} : memref<8x8x128xf32, #tpu.memory_space<vmem>>, vector<1x8x128xf32>,
    %c5_i32 = arith.constant 5 : i32
    %134 = arith.index_cast %c5_i32 : i32 to index
    %c0_72 = arith.constant 0 : index
    %c0_73 = arith.constant 0 : index
    %135 = vector.load %arg1[%134, %c0_72, %c0_73] : memref<8x8x128xf32, #tpu.memory_space<vmem>>, vector<1x8x128xf32>
    %136 = vector.shape_cast %135 : vector<1x8x128xf32> to vector<8x128xf32>
    %c0_74 = arith.constant 0 : index
    %c0_75 = arith.constant 0 : index
    %137 = vector.load %arg3[%c0_74, %c0_75] : memref<128x128xf32, #tpu.memory_space<vmem>>, vector<128x128xf32>
    %cst_76 = arith.constant dense<0.000000e+00> : vector<8x128xf32>
    %138 = tpu.matmul %113, %137, %cst_76 {dimension_numbers = #tpu.dot_dimension_numbers<[1], [0], [0], [1], [0, 0, 1, 1], [], []>} : vector<8x128xf32>, vector<128x128xf32>, vector<8x128xf32> -> vector<8x128xf32>
    %139 = arith.addf %136, %138 : vector<8x128xf32>
    %c0_77 = arith.constant 0 : index
    %c0_78 = arith.constant 0 : index
    %140 = vector.load %arg4[%c0_77, %c0_78] : memref<128x128xf32, #tpu.memory_space<vmem>>, vector<128x128xf32>
    %cst_79 = arith.constant dense<0.000000e+00> : vector<8x128xf32>
    %141 = tpu.matmul %139, %140, %cst_79 {dimension_numbers = #tpu.dot_dimension_numbers<[1], [0], [0], [1], [0, 0, 1, 1], [], []>} : vector<8x128xf32>, vector<128x128xf32>, vector<8x128xf32> -> vector<8x128xf32>
    %c0_80 = arith.constant 0 : index
    %c0_81 = arith.constant 0 : index
    %142 = vector.load %arg5[%c0_80, %c0_81] : memref<1x128xf32, #tpu.memory_space<vmem>>, vector<1x128xf32>
    %143 = vector.broadcast %142 : vector<1x128xf32> to vector<8x128xf32>
    %144 = arith.addf %141, %143 : vector<8x128xf32>
    %cst_82 = arith.constant dense<0xFF800000> : vector<8xf32>
    %145 = vector.multi_reduction <maximumf>, %144, %cst_82 [1] : vector<8x128xf32> to vector<8xf32>
    %146 = vector.shape_cast %145 : vector<8xf32> to vector<8x1xf32>
    %147 = vector.broadcast %146 : vector<8x1xf32> to vector<8x128xf32>
    %148 = arith.subf %144, %147 : vector<8x128xf32>
    %149 = math.exp %148 : vector<8x128xf32>
    %cst_83 = arith.constant dense<0.000000e+00> : vector<8xf32>
    %150 = vector.multi_reduction <add>, %149, %cst_83 [1] : vector<8x128xf32> to vector<8xf32>
    %151 = vector.shape_cast %150 : vector<8xf32> to vector<8x1xf32>
    %152 = math.log %151 : vector<8x1xf32>
    %153 = arith.addf %146, %152 : vector<8x1xf32>
    %154 = vector.broadcast %153 : vector<8x1xf32> to vector<8x128xf32>
    %155 = arith.subf %144, %154 : vector<8x128xf32>
    %156 = arith.index_cast %c5_i32 : i32 to index
    %c0_84 = arith.constant 0 : index
    %c0_85 = arith.constant 0 : index
    %157 = vector.load %arg6[%156, %c0_84, %c0_85] : memref<8x8x128xf32, #tpu.memory_space<vmem>>, vector<1x8x128xf32>
    %158 = vector.shape_cast %157 : vector<1x8x128xf32> to vector<8x128xf32>
    %159 = vector.shape_cast %155 : vector<8x128xf32> to vector<1x8x128xf32>
    tpu.vector_store %arg6[%156, %c0_84, %c0_85], %159 {strides = array<i32>} : memref<8x8x128xf32, #tpu.memory_space<vmem>>, vector<1x8x128xf32>,
    %c6_i32 = arith.constant 6 : i32
    %160 = arith.index_cast %c6_i32 : i32 to index
    %c0_86 = arith.constant 0 : index
    %c0_87 = arith.constant 0 : index
    %161 = vector.load %arg1[%160, %c0_86, %c0_87] : memref<8x8x128xf32, #tpu.memory_space<vmem>>, vector<1x8x128xf32>
    %162 = vector.shape_cast %161 : vector<1x8x128xf32> to vector<8x128xf32>
    %c0_88 = arith.constant 0 : index
    %c0_89 = arith.constant 0 : index
    %163 = vector.load %arg3[%c0_88, %c0_89] : memref<128x128xf32, #tpu.memory_space<vmem>>, vector<128x128xf32>
    %cst_90 = arith.constant dense<0.000000e+00> : vector<8x128xf32>
    %164 = tpu.matmul %139, %163, %cst_90 {dimension_numbers = #tpu.dot_dimension_numbers<[1], [0], [0], [1], [0, 0, 1, 1], [], []>} : vector<8x128xf32>, vector<128x128xf32>, vector<8x128xf32> -> vector<8x128xf32>
    %165 = arith.addf %162, %164 : vector<8x128xf32>
    %c0_91 = arith.constant 0 : index
    %c0_92 = arith.constant 0 : index
    %166 = vector.load %arg4[%c0_91, %c0_92] : memref<128x128xf32, #tpu.memory_space<vmem>>, vector<128x128xf32>
    %cst_93 = arith.constant dense<0.000000e+00> : vector<8x128xf32>
    %167 = tpu.matmul %165, %166, %cst_93 {dimension_numbers = #tpu.dot_dimension_numbers<[1], [0], [0], [1], [0, 0, 1, 1], [], []>} : vector<8x128xf32>, vector<128x128xf32>, vector<8x128xf32> -> vector<8x128xf32>
    %c0_94 = arith.constant 0 : index
    %c0_95 = arith.constant 0 : index
    %168 = vector.load %arg5[%c0_94, %c0_95] : memref<1x128xf32, #tpu.memory_space<vmem>>, vector<1x128xf32>
    %169 = vector.broadcast %168 : vector<1x128xf32> to vector<8x128xf32>
    %170 = arith.addf %167, %169 : vector<8x128xf32>
    %cst_96 = arith.constant dense<0xFF800000> : vector<8xf32>
    %171 = vector.multi_reduction <maximumf>, %170, %cst_96 [1] : vector<8x128xf32> to vector<8xf32>
    %172 = vector.shape_cast %171 : vector<8xf32> to vector<8x1xf32>
    %173 = vector.broadcast %172 : vector<8x1xf32> to vector<8x128xf32>
    %174 = arith.subf %170, %173 : vector<8x128xf32>
    %175 = math.exp %174 : vector<8x128xf32>
    %cst_97 = arith.constant dense<0.000000e+00> : vector<8xf32>
    %176 = vector.multi_reduction <add>, %175, %cst_97 [1] : vector<8x128xf32> to vector<8xf32>
    %177 = vector.shape_cast %176 : vector<8xf32> to vector<8x1xf32>
    %178 = math.log %177 : vector<8x1xf32>
    %179 = arith.addf %172, %178 : vector<8x1xf32>
    %180 = vector.broadcast %179 : vector<8x1xf32> to vector<8x128xf32>
    %181 = arith.subf %170, %180 : vector<8x128xf32>
    %182 = arith.index_cast %c6_i32 : i32 to index
    %c0_98 = arith.constant 0 : index
    %c0_99 = arith.constant 0 : index
    %183 = vector.load %arg6[%182, %c0_98, %c0_99] : memref<8x8x128xf32, #tpu.memory_space<vmem>>, vector<1x8x128xf32>
    %184 = vector.shape_cast %183 : vector<1x8x128xf32> to vector<8x128xf32>
    %185 = vector.shape_cast %181 : vector<8x128xf32> to vector<1x8x128xf32>
    tpu.vector_store %arg6[%182, %c0_98, %c0_99], %185 {strides = array<i32>} : memref<8x8x128xf32, #tpu.memory_space<vmem>>, vector<1x8x128xf32>,
    %c7_i32 = arith.constant 7 : i32
    %186 = arith.index_cast %c7_i32 : i32 to index
    %c0_100 = arith.constant 0 : index
    %c0_101 = arith.constant 0 : index
    %187 = vector.load %arg1[%186, %c0_100, %c0_101] : memref<8x8x128xf32, #tpu.memory_space<vmem>>, vector<1x8x128xf32>
    %188 = vector.shape_cast %187 : vector<1x8x128xf32> to vector<8x128xf32>
    %c0_102 = arith.constant 0 : index
    %c0_103 = arith.constant 0 : index
    %189 = vector.load %arg3[%c0_102, %c0_103] : memref<128x128xf32, #tpu.memory_space<vmem>>, vector<128x128xf32>
    %cst_104 = arith.constant dense<0.000000e+00> : vector<8x128xf32>
    %190 = tpu.matmul %165, %189, %cst_104 {dimension_numbers = #tpu.dot_dimension_numbers<[1], [0], [0], [1], [0, 0, 1, 1], [], []>} : vector<8x128xf32>, vector<128x128xf32>, vector<8x128xf32> -> vector<8x128xf32>
    %191 = arith.addf %188, %190 : vector<8x128xf32>
    %c0_105 = arith.constant 0 : index
    %c0_106 = arith.constant 0 : index
    %192 = vector.load %arg4[%c0_105, %c0_106] : memref<128x128xf32, #tpu.memory_space<vmem>>, vector<128x128xf32>
    %cst_107 = arith.constant dense<0.000000e+00> : vector<8x128xf32>
    %193 = tpu.matmul %191, %192, %cst_107 {dimension_numbers = #tpu.dot_dimension_numbers<[1], [0], [0], [1], [0, 0, 1, 1], [], []>} : vector<8x128xf32>, vector<128x128xf32>, vector<8x128xf32> -> vector<8x128xf32>
    %c0_108 = arith.constant 0 : index
    %c0_109 = arith.constant 0 : index
    %194 = vector.load %arg5[%c0_108, %c0_109] : memref<1x128xf32, #tpu.memory_space<vmem>>, vector<1x128xf32>
    %195 = vector.broadcast %194 : vector<1x128xf32> to vector<8x128xf32>
    %196 = arith.addf %193, %195 : vector<8x128xf32>
    %cst_110 = arith.constant dense<0xFF800000> : vector<8xf32>
    %197 = vector.multi_reduction <maximumf>, %196, %cst_110 [1] : vector<8x128xf32> to vector<8xf32>
    %198 = vector.shape_cast %197 : vector<8xf32> to vector<8x1xf32>
    %199 = vector.broadcast %198 : vector<8x1xf32> to vector<8x128xf32>
    %200 = arith.subf %196, %199 : vector<8x128xf32>
    %201 = math.exp %200 : vector<8x128xf32>
    %cst_111 = arith.constant dense<0.000000e+00> : vector<8xf32>
    %202 = vector.multi_reduction <add>, %201, %cst_111 [1] : vector<8x128xf32> to vector<8xf32>
    %203 = vector.shape_cast %202 : vector<8xf32> to vector<8x1xf32>
    %204 = math.log %203 : vector<8x1xf32>
    %205 = arith.addf %198, %204 : vector<8x1xf32>
    %206 = vector.broadcast %205 : vector<8x1xf32> to vector<8x128xf32>
    %207 = arith.subf %196, %206 : vector<8x128xf32>
    %208 = arith.index_cast %c7_i32 : i32 to index
    %c0_112 = arith.constant 0 : index
    %c0_113 = arith.constant 0 : index
    %209 = vector.load %arg6[%208, %c0_112, %c0_113] : memref<8x8x128xf32, #tpu.memory_space<vmem>>, vector<1x8x128xf32>
    %210 = vector.shape_cast %209 : vector<1x8x128xf32> to vector<8x128xf32>
    %211 = vector.shape_cast %207 : vector<8x128xf32> to vector<1x8x128xf32>
    tpu.vector_store %arg6[%208, %c0_112, %c0_113], %211 {strides = array<i32>} : memref<8x8x128xf32, #tpu.memory_space<vmem>>, vector<1x8x128xf32>,
    %c8_i32 = arith.constant 8 : i32
    %c0_114 = arith.constant 0 : index
    %c0_115 = arith.constant 0 : index
    %212 = vector.load %arg7[%c0_114, %c0_115] : memref<8x128xf32, #tpu.memory_space<vmem>>, vector<8x128xf32>
    tpu.vector_store %arg7[%c0_114, %c0_115], %191 {strides = array<i32>} : memref<8x128xf32, #tpu.memory_space<vmem>>, vector<8x128xf32>,
    return
  }
  func.func @transform_0(%arg0: i32) -> (i32, i32, i32) {
    %c0_i32 = arith.constant 0 : i32
    %c0_i32_0 = arith.constant 0 : i32
    %c0_i32_1 = arith.constant 0 : i32
    return %arg0, %c0_i32, %c0_i32_0 : i32, i32, i32
  }
  func.func @transform_1(%arg0: i32) -> (i32, i32) {
    %c0_i32 = arith.constant 0 : i32
    %c0_i32_0 = arith.constant 0 : i32
    %c0_i32_1 = arith.constant 0 : i32
    return %c0_i32, %c0_i32_0 : i32, i32
  }
  func.func @transform_2(%arg0: i32) -> (i32, i32) {
    %c0_i32 = arith.constant 0 : i32
    %c0_i32_0 = arith.constant 0 : i32
    %c0_i32_1 = arith.constant 0 : i32
    return %c0_i32, %c0_i32_0 : i32, i32
  }
  func.func @transform_3(%arg0: i32) -> (i32, i32) {
    %c0_i32 = arith.constant 0 : i32
    %c0_i32_0 = arith.constant 0 : i32
    %c0_i32_1 = arith.constant 0 : i32
    return %c0_i32, %c0_i32_0 : i32, i32
  }
  func.func @transform_4(%arg0: i32) -> (i32, i32) {
    %c0_i32 = arith.constant 0 : i32
    %c0_i32_0 = arith.constant 0 : i32
    %c0_i32_1 = arith.constant 0 : i32
    return %c0_i32, %c0_i32_0 : i32, i32
  }
  func.func @transform_5(%arg0: i32) -> (i32, i32, i32) {
    %c0_i32 = arith.constant 0 : i32
    %c0_i32_0 = arith.constant 0 : i32
    %c0_i32_1 = arith.constant 0 : i32
    return %arg0, %c0_i32, %c0_i32_0 : i32, i32, i32
  }
  func.func @transform_6(%arg0: i32) -> (i32, i32) {
    %c0_i32 = arith.constant 0 : i32
    %c0_i32_0 = arith.constant 0 : i32
    %c0_i32_1 = arith.constant 0 : i32
    return %c0_i32, %c0_i32_0 : i32, i32
  }
}

</mosaic_0001>

<llo_original>
// kernel: rnn_forward.1
$region0: #{rnn_forward.1}
  #allocation0 [shape = 'u32[]', space=smem, size = 0x4, offset = 0x4, fixed_abs, tag = 'smem constant byte address 0x4 - core index']
  #allocation1 [shape = 'u32[144,128]{1,0:T(1,128)}', space=vmem, size = 0x12000, scoped, tag = 'internal scratch']
  %s0 = inlined_call_operand.vmem [shape: f32[8,8,128], index: 0, kind: input, shape index: {}]
  %s1 = inlined_call_operand.vmem [shape: f32[8,128], index: 1, kind: input, shape index: {}]
  %s2 = inlined_call_operand.vmem [shape: f32[128,128], index: 2, kind: input, shape index: {}]
  %s3 = inlined_call_operand.hbm [shape: f32[128,128], index: 3, kind: input, shape index: {}]
  %s4 = inlined_call_operand.vmem [shape: f32[1,128], index: 4, kind: input, shape index: {}]
  %s5 = inlined_call_operand.vmem [shape: f32[8,8,128], index: 5, kind: output, shape index: {0}]
  %s6 = inlined_call_operand.vmem [shape: f32[8,128], index: 6, kind: output, shape index: {1}]
  %7 = xla_tuple %s5, %s6
  %s8 = sld [smem:[#allocation0]]
  $region46: #{rnn_forward.1} parent=0
    _
  %s10 = ssub.s32 1, %s8
  %s11 = scalar_select 0, %s10, %s8
  $region1: #{rnn_forward.1} parent=0
    #allocation2 [shape = 'u8[65536]{0}', space=vmem, size = 0x10000, scoped, tag = 'input window, operand 3, single buffered']
    #allocation3 [shape = 's32[1]{0}', space=sflag, size = 0x4, scoped, tag = 'scoped memory for rnn_forward.1']
    %12 = vsyncpa [#allocation3], 0
    // Predicated region
    $region2: #{rnn_forward.1} parent=1 // pred_check
      _
    $region3: #{rnn_forward.1} parent=1 // pred_check_branch
      %14 = sbr.rel (0) target = $region5
    $region4: #{rnn_forward.1} parent=1 // pred_region
      _
    $region5: #{rnn_forward.1} parent=1 // pred_fallthru
      _
    // Predicated region
    $region6: #{rnn_forward.1} parent=1 // pred_check
      _
    $region7: #{rnn_forward.1} parent=1 // pred_check_branch
      %16 = sbr.rel (0) target = $region9
    $region8: #{rnn_forward.1} parent=1 // pred_region
      _
    $region9: #{rnn_forward.1} parent=1 // pred_fallthru
      _
    // Predicated region
    $region10: #{rnn_forward.1} parent=1 // pred_check
      _
    $region11: #{rnn_forward.1} parent=1 // pred_check_branch
      %18 = sbr.rel (0) target = $region13
    $region12: #{rnn_forward.1} parent=1 // pred_region
      _
    $region13: #{rnn_forward.1} parent=1 // pred_fallthru
      _
    // Predicated region
    $region14: #{rnn_forward.1} parent=1 // pred_check
      _
    $region15: #{rnn_forward.1} parent=1 // pred_check_branch
      %20 = sbr.rel (0) target = $region17
    $region16: #{rnn_forward.1} parent=1 // pred_region
      %s22 = ssub.s32 2048, 2048
      %23 = vsyncadd [#allocation3], %s22
      %s24 = sshll.u32 [#allocation2], 4
      %s25 = int_to_ptr.vmem [resolvable:$true] %s24
      %30 = dma.hbm_to_vmem [thread:$0]  %s3, 2048, %s25, [#allocation3], 128, 128, 8
    $region17: #{rnn_forward.1} parent=1 // pred_fallthru
      _
    // Predicated region
    $region18: #{rnn_forward.1} parent=1 // pred_check
      _
    $region19: #{rnn_forward.1} parent=1 // pred_check_branch
      %32 = sbr.rel (0) target = $region21
    $region20: #{rnn_forward.1} parent=1 // pred_region
      _
    $region21: #{rnn_forward.1} parent=1 // pred_fallthru
      _
    // Predicated region
    $region22: #{rnn_forward.1} parent=1 // pred_check
      _
    $region23: #{rnn_forward.1} parent=1 // pred_check_branch
      %34 = sbr.rel (0) target = $region25
    $region24: #{rnn_forward.1} parent=1 // pred_region
      %35 = dma.done [#allocation3], 2048
    $region25: #{rnn_forward.1} parent=1 // pred_fallthru
      _
    %p36 = scmp.eq.s32.totalorder 0, 0
    // Predicated region
    $region26: #{rnn_forward.1} parent=1 // pred_check
      %p37 = pneg %p36
    $region27: #{rnn_forward.1} parent=1 // pred_check_branch
      %39 = sbr.rel (%p37) target = $region29
    $region28: #{rnn_forward.1} parent=1 // pred_region
      %v40 = vld [vmem:[%s1] sm:$0xff]
      %41 = vst [vmem:[%s6] sm:$0xff] %v40
    $region29: #{rnn_forward.1} parent=1 // pred_fallthru
      _
    %v42 = vld [vmem:[%s6] sm:$0xff]
    %v43 = vld [vmem:[%s0] sm:$0xff]
    %v44 = vld [vmem:[%s2] sm:$0xff]
    %v45 = vld [vmem:[%s2 + $0x8] sm:$0xff]
    %v46 = vld [vmem:[%s2 + $0x10] sm:$0xff]
    %v47 = vld [vmem:[%s2 + $0x18] sm:$0xff]
    %v48 = vld [vmem:[%s2 + $0x20] sm:$0xff]
    %v49 = vld [vmem:[%s2 + $0x28] sm:$0xff]
    %v50 = vld [vmem:[%s2 + $0x30] sm:$0xff]
    %v51 = vld [vmem:[%s2 + $0x38] sm:$0xff]
    %v52 = vld [vmem:[%s2 + $0x40] sm:$0xff]
    %v53 = vld [vmem:[%s2 + $0x48] sm:$0xff]
    %v54 = vld [vmem:[%s2 + $0x50] sm:$0xff]
    %v55 = vld [vmem:[%s2 + $0x58] sm:$0xff]
    %v56 = vld [vmem:[%s2 + $0x60] sm:$0xff]
    %v57 = vld [vmem:[%s2 + $0x68] sm:$0xff]
    %v58 = vld [vmem:[%s2 + $0x70] sm:$0xff]
    %v59 = vld [vmem:[%s2 + $0x78] sm:$0xff]
    %60 = vmatprep.subr.mxu0 0.0
    %61 = vmatpush1.msra.mxu0 %v59
    %62 = vmatprep.subr.mxu0 0.0
    %63 = vmatpush1.msra.mxu0 %v58
    %64 = vmatprep.subr.mxu0 0.0
    %65 = vmatpush1.msra.mxu0 %v57
    %66 = vmatprep.subr.mxu0 0.0
    %67 = vmatpush1.msra.mxu0 %v56
    %68 = vmatprep.subr.mxu0 0.0
    %69 = vmatpush1.msra.mxu0 %v55
    %70 = vmatprep.subr.mxu0 0.0
    %71 = vmatpush1.msra.mxu0 %v54
    %72 = vmatprep.subr.mxu0 0.0
    %73 = vmatpush1.msra.mxu0 %v53
    %74 = vmatprep.subr.mxu0 0.0
    %75 = vmatpush1.msra.mxu0 %v52
    %76 = vmatprep.subr.mxu0 0.0
    %77 = vmatpush1.msra.mxu0 %v51
    %78 = vmatprep.subr.mxu0 0.0
    %79 = vmatpush1.msra.mxu0 %v50
    %80 = vmatprep.subr.mxu0 0.0
    %81 = vmatpush1.msra.mxu0 %v49
    %82 = vmatprep.subr.mxu0 0.0
    %83 = vmatpush1.msra.mxu0 %v48
    %84 = vmatprep.subr.mxu0 0.0
    %85 = vmatpush1.msra.mxu0 %v47
    %86 = vmatprep.subr.mxu0 0.0
    %87 = vmatpush1.msra.mxu0 %v46
    %88 = vmatprep.subr.mxu0 0.0
    %89 = vmatpush1.msra.mxu0 %v45
    %90 = vmatprep.subr.mxu0 0.0
    %91 = vmatpush1.msra.mxu0 %v44
    %92 = vmatprep.subr.mxu0 0.0
    %93 = vmatpush2.msra.mxu0 0.0
    %94 = vmatprep.subr.mxu0 0.0
    %95 = vmatpush2.msra.mxu0 0.0
    %96 = vmatprep.subr.mxu0 0.0
    %97 = vmatpush2.msra.mxu0 0.0
    %98 = vmatprep.subr.mxu0 0.0
    %99 = vmatpush2.msra.mxu0 0.0
    %100 = vmatprep.subr.mxu0 0.0
    %101 = vmatpush2.msra.mxu0 0.0
    %102 = vmatprep.subr.mxu0 0.0
    %103 = vmatpush2.msra.mxu0 0.0
    %104 = vmatprep.subr.mxu0 0.0
    %105 = vmatpush2.msra.mxu0 0.0
    %106 = vmatprep.subr.mxu0 0.0
    %107 = vmatpush2.msra.mxu0 0.0
    %108 = vmatprep.subr.mxu0 0.0
    %109 = vmatpush2.msra.mxu0 0.0
    %110 = vmatprep.subr.mxu0 0.0
    %111 = vmatpush2.msra.mxu0 0.0
    %112 = vmatprep.subr.mxu0 0.0
    %113 = vmatpush2.msra.mxu0 0.0
    %114 = vmatprep.subr.mxu0 0.0
    %115 = vmatpush2.msra.mxu0 0.0
    %116 = vmatprep.subr.mxu0 0.0
    %117 = vmatpush2.msra.mxu0 0.0
    %118 = vmatprep.subr.mxu0 0.0
    %119 = vmatpush2.msra.mxu0 0.0
    %120 = vmatprep.subr.mxu0 0.0
    %121 = vmatpush2.msra.mxu0 0.0
    %122 = vmatprep.subr.mxu0 0.0
    %123 = vmatpush2.msra.mxu0 0.0
    %124 = vmatprep.mubr.f32.mxu0 0.0
    %125 = vmatmul.mubr.f32.gmra.mxu0 %v42
    %v126 = vpop.f32.mrf.mxu0
    %v127 = vadd.f32 0.0, %v126
    %v128 = vpop.f32.mrf.mxu0
    %129 = vdwg.mxu0
    %v130 = vadd.f32 %v43, %v127
    %v131 = vld [vmem:[#allocation2] sm:$0xff]
    %v132 = vld [vmem:[#allocation2 + $0x8] sm:$0xff]
    %v133 = vld [vmem:[#allocation2 + $0x10] sm:$0xff]
    %v134 = vld [vmem:[#allocation2 + $0x18] sm:$0xff]
    %v135 = vld [vmem:[#allocation2 + $0x20] sm:$0xff]
    %v136 = vld [vmem:[#allocation2 + $0x28] sm:$0xff]
    %v137 = vld [vmem:[#allocation2 + $0x30] sm:$0xff]
    %v138 = vld [vmem:[#allocation2 + $0x38] sm:$0xff]
    %v139 = vld [vmem:[#allocation2 + $0x40] sm:$0xff]
    %v140 = vld [vmem:[#allocation2 + $0x48] sm:$0xff]
    %v141 = vld [vmem:[#allocation2 + $0x50] sm:$0xff]
    %v142 = vld [vmem:[#allocation2 + $0x58] sm:$0xff]
    %v143 = vld [vmem:[#allocation2 + $0x60] sm:$0xff]
    %v144 = vld [vmem:[#allocation2 + $0x68] sm:$0xff]
    %v145 = vld [vmem:[#allocation2 + $0x70] sm:$0xff]
    %v146 = vld [vmem:[#allocation2 + $0x78] sm:$0xff]
    %v147 = vld [vmem:[%s4] sm:$0x1]
    %v149 = vlaneseq
    %v150 = vshrl.u32 %v149, 7
    %v151 = vsub.s32 0, %v150
    %v152 = vrot.slane %v147, %v151
    %154 = vmatprep.subr.mxu0 0.0
    %155 = vmatpush1.msra.mxu0 %v146
    %156 = vmatprep.subr.mxu0 0.0
    %157 = vmatpush1.msra.mxu0 %v145
    %158 = vmatprep.subr.mxu0 0.0
    %159 = vmatpush1.msra.mxu0 %v144
    %160 = vmatprep.subr.mxu0 0.0
    %161 = vmatpush1.msra.mxu0 %v143
    %162 = vmatprep.subr.mxu0 0.0
    %163 = vmatpush1.msra.mxu0 %v142
    %164 = vmatprep.subr.mxu0 0.0
    %165 = vmatpush1.msra.mxu0 %v141
    %166 = vmatprep.subr.mxu0 0.0
    %167 = vmatpush1.msra.mxu0 %v140
    %168 = vmatprep.subr.mxu0 0.0
    %169 = vmatpush1.msra.mxu0 %v139
    %170 = vmatprep.subr.mxu0 0.0
    %171 = vmatpush1.msra.mxu0 %v138
    %172 = vmatprep.subr.mxu0 0.0
    %173 = vmatpush1.msra.mxu0 %v137
    %174 = vmatprep.subr.mxu0 0.0
    %175 = vmatpush1.msra.mxu0 %v136
    %176 = vmatprep.subr.mxu0 0.0
    %177 = vmatpush1.msra.mxu0 %v135
    %178 = vmatprep.subr.mxu0 0.0
    %179 = vmatpush1.msra.mxu0 %v134
    %180 = vmatprep.subr.mxu0 0.0
    %181 = vmatpush1.msra.mxu0 %v133
    %182 = vmatprep.subr.mxu0 0.0
    %183 = vmatpush1.msra.mxu0 %v132
    %184 = vmatprep.subr.mxu0 0.0
    %185 = vmatpush1.msra.mxu0 %v131
    %186 = vmatprep.subr.mxu0 0.0
    %187 = vmatpush2.msra.mxu0 0.0
    %188 = vmatprep.subr.mxu0 0.0
    %189 = vmatpush2.msra.mxu0 0.0
    %190 = vmatprep.subr.mxu0 0.0
    %191 = vmatpush2.msra.mxu0 0.0
    %192 = vmatprep.subr.mxu0 0.0
    %193 = vmatpush2.msra.mxu0 0.0
    %194 = vmatprep.subr.mxu0 0.0
    %195 = vmatpush2.msra.mxu0 0.0
    %196 = vmatprep.subr.mxu0 0.0
    %197 = vmatpush2.msra.mxu0 0.0
    %198 = vmatprep.subr.mxu0 0.0
    %199 = vmatpush2.msra.mxu0 0.0
    %200 = vmatprep.subr.mxu0 0.0
    %201 = vmatpush2.msra.mxu0 0.0
    %202 = vmatprep.subr.mxu0 0.0
    %203 = vmatpush2.msra.mxu0 0.0
    %204 = vmatprep.subr.mxu0 0.0
    %205 = vmatpush2.msra.mxu0 0.0
    %206 = vmatprep.subr.mxu0 0.0
    %207 = vmatpush2.msra.mxu0 0.0
    %208 = vmatprep.subr.mxu0 0.0
    %209 = vmatpush2.msra.mxu0 0.0
    %210 = vmatprep.subr.mxu0 0.0
    %211 = vmatpush2.msra.mxu0 0.0
    %212 = vmatprep.subr.mxu0 0.0
    %213 = vmatpush2.msra.mxu0 0.0
    %214 = vmatprep.subr.mxu0 0.0
    %215 = vmatpush2.msra.mxu0 0.0
    %216 = vmatprep.subr.mxu0 0.0
    %217 = vmatpush2.msra.mxu0 0.0
    %218 = vmatprep.mubr.f32.mxu0 0.0
    %219 = vmatmul.mubr.f32.gmra.mxu0 %v130
    %v220 = vpop.f32.mrf.mxu0
    %v221 = vadd.f32 %v152, %v220
    %v222 = vpop.f32.mrf.mxu0
    %223 = vdwg.mxu0
    %224 = vmax.xlane.f32.xlu0 %v221
    %v225 = vpop.xlane.xlu0 %224
    %v226 = vsub.f32 %v221, %v225
    %v227 = vmul.f32 %v226, 1.442695
    %v228 = vpow.pop %v227
    %229 = vadd.xlane.f32.xlu0 %v228
    %v230 = vpop.xlane.xlu0 %229
    %v231 = vlog2.pop %v230
    %v232 = vmul.f32 %v231, 0.6931472
    %v233 = vadd.f32 %v225, %v232
    %v234 = vsub.f32 %v221, %v233
    %235 = vst [vmem:[%s5] sm:$0xff] %v234
    %s236 = scalar_lea.vmem %s0, 8
    %v237 = vld [vmem:[%s236] sm:$0xff]
    %v238 = vld [vmem:[%s2] sm:$0xff]
    %v239 = vld [vmem:[%s2 + $0x8] sm:$0xff]
    %v240 = vld [vmem:[%s2 + $0x10] sm:$0xff]
    %v241 = vld [vmem:[%s2 + $0x18] sm:$0xff]
    %v242 = vld [vmem:[%s2 + $0x20] sm:$0xff]
    %v243 = vld [vmem:[%s2 + $0x28] sm:$0xff]
    %v244 = vld [vmem:[%s2 + $0x30] sm:$0xff]
    %v245 = vld [vmem:[%s2 + $0x38] sm:$0xff]
    %v246 = vld [vmem:[%s2 + $0x40] sm:$0xff]
    %v247 = vld [vmem:[%s2 + $0x48] sm:$0xff]
    %v248 = vld [vmem:[%s2 + $0x50] sm:$0xff]
    %v249 = vld [vmem:[%s2 + $0x58] sm:$0xff]
    %v250 = vld [vmem:[%s2 + $0x60] sm:$0xff]
    %v251 = vld [vmem:[%s2 + $0x68] sm:$0xff]
    %v252 = vld [vmem:[%s2 + $0x70] sm:$0xff]
    %v253 = vld [vmem:[%s2 + $0x78] sm:$0xff]
    %254 = vmatprep.subr.mxu0 0.0
    %255 = vmatpush1.msra.mxu0 %v253
    %256 = vmatprep.subr.mxu0 0.0
    %257 = vmatpush1.msra.mxu0 %v252
    %258 = vmatprep.subr.mxu0 0.0
    %259 = vmatpush1.msra.mxu0 %v251
    %260 = vmatprep.subr.mxu0 0.0
    %261 = vmatpush1.msra.mxu0 %v250
    %262 = vmatprep.subr.mxu0 0.0
    %263 = vmatpush1.msra.mxu0 %v249
    %264 = vmatprep.subr.mxu0 0.0
    %265 = vmatpush1.msra.mxu0 %v248
    %266 = vmatprep.subr.mxu0 0.0
    %267 = vmatpush1.msra.mxu0 %v247
    %268 = vmatprep.subr.mxu0 0.0
    %269 = vmatpush1.msra.mxu0 %v246
    %270 = vmatprep.subr.mxu0 0.0
    %271 = vmatpush1.msra.mxu0 %v245
    %272 = vmatprep.subr.mxu0 0.0
    %273 = vmatpush1.msra.mxu0 %v244
    %274 = vmatprep.subr.mxu0 0.0
    %275 = vmatpush1.msra.mxu0 %v243
    %276 = vmatprep.subr.mxu0 0.0
    %277 = vmatpush1.msra.mxu0 %v242
    %278 = vmatprep.subr.mxu0 0.0
    %279 = vmatpush1.msra.mxu0 %v241
    %280 = vmatprep.subr.mxu0 0.0
    %281 = vmatpush1.msra.mxu0 %v240
    %282 = vmatprep.subr.mxu0 0.0
    %283 = vmatpush1.msra.mxu0 %v239
    %284 = vmatprep.subr.mxu0 0.0
    %285 = vmatpush1.msra.mxu0 %v238
    %286 = vmatprep.subr.mxu0 0.0
    %287 = vmatpush2.msra.mxu0 0.0
    %288 = vmatprep.subr.mxu0 0.0
    %289 = vmatpush2.msra.mxu0 0.0
    %290 = vmatprep.subr.mxu0 0.0
    %291 = vmatpush2.msra.mxu0 0.0
    %292 = vmatprep.subr.mxu0 0.0
    %293 = vmatpush2.msra.mxu0 0.0
    %294 = vmatprep.subr.mxu0 0.0
    %295 = vmatpush2.msra.mxu0 0.0
    %296 = vmatprep.subr.mxu0 0.0
    %297 = vmatpush2.msra.mxu0 0.0
    %298 = vmatprep.subr.mxu0 0.0
    %299 = vmatpush2.msra.mxu0 0.0
    %300 = vmatprep.subr.mxu0 0.0
    %301 = vmatpush2.msra.mxu0 0.0
    %302 = vmatprep.subr.mxu0 0.0
    %303 = vmatpush2.msra.mxu0 0.0
    %304 = vmatprep.subr.mxu0 0.0
    %305 = vmatpush2.msra.mxu0 0.0
    %306 = vmatprep.subr.mxu0 0.0
    %307 = vmatpush2.msra.mxu0 0.0
    %308 = vmatprep.subr.mxu0 0.0
    %309 = vmatpush2.msra.mxu0 0.0
    %310 = vmatprep.subr.mxu0 0.0
    %311 = vmatpush2.msra.mxu0 0.0
    %312 = vmatprep.subr.mxu0 0.0
    %313 = vmatpush2.msra.mxu0 0.0
    %314 = vmatprep.subr.mxu0 0.0
    %315 = vmatpush2.msra.mxu0 0.0
    %316 = vmatprep.subr.mxu0 0.0
    %317 = vmatpush2.msra.mxu0 0.0
    %318 = vmatprep.mubr.f32.mxu0 0.0
    %319 = vmatmul.mubr.f32.gmra.mxu0 %v130
    %v320 = vpop.f32.mrf.mxu0
    %v321 = vadd.f32 0.0, %v320
    %v322 = vpop.f32.mrf.mxu0
    %323 = vdwg.mxu0
    %v324 = vadd.f32 %v237, %v321
    %v325 = vld [vmem:[#allocation2] sm:$0xff]
    %v326 = vld [vmem:[#allocation2 + $0x8] sm:$0xff]
    %v327 = vld [vmem:[#allocation2 + $0x10] sm:$0xff]
    %v328 = vld [vmem:[#allocation2 + $0x18] sm:$0xff]
    %v329 = vld [vmem:[#allocation2 + $0x20] sm:$0xff]
    %v330 = vld [vmem:[#allocation2 + $0x28] sm:$0xff]
    %v331 = vld [vmem:[#allocation2 + $0x30] sm:$0xff]
    %v332 = vld [vmem:[#allocation2 + $0x38] sm:$0xff]
    %v333 = vld [vmem:[#allocation2 + $0x40] sm:$0xff]
    %v334 = vld [vmem:[#allocation2 + $0x48] sm:$0xff]
    %v335 = vld [vmem:[#allocation2 + $0x50] sm:$0xff]
    %v336 = vld [vmem:[#allocation2 + $0x58] sm:$0xff]
    %v337 = vld [vmem:[#allocation2 + $0x60] sm:$0xff]
    %v338 = vld [vmem:[#allocation2 + $0x68] sm:$0xff]
    %v339 = vld [vmem:[#allocation2 + $0x70] sm:$0xff]
    %v340 = vld [vmem:[#allocation2 + $0x78] sm:$0xff]
    %v341 = vld [vmem:[%s4] sm:$0x1]
    %v343 = vlaneseq
    %v344 = vshrl.u32 %v343, 7
    %v345 = vsub.s32 0, %v344
    %v346 = vrot.slane %v341, %v345
    %348 = vmatprep.subr.mxu0 0.0
    %349 = vmatpush1.msra.mxu0 %v340
    %350 = vmatprep.subr.mxu0 0.0
    %351 = vmatpush1.msra.mxu0 %v339
    %352 = vmatprep.subr.mxu0 0.0
    %353 = vmatpush1.msra.mxu0 %v338
    %354 = vmatprep.subr.mxu0 0.0
    %355 = vmatpush1.msra.mxu0 %v337
    %356 = vmatprep.subr.mxu0 0.0
    %357 = vmatpush1.msra.mxu0 %v336
    %358 = vmatprep.subr.mxu0 0.0
    %359 = vmatpush1.msra.mxu0 %v335
    %360 = vmatprep.subr.mxu0 0.0
    %361 = vmatpush1.msra.mxu0 %v334
    %362 = vmatprep.subr.mxu0 0.0
    %363 = vmatpush1.msra.mxu0 %v333
    %364 = vmatprep.subr.mxu0 0.0
    %365 = vmatpush1.msra.mxu0 %v332
    %366 = vmatprep.subr.mxu0 0.0
    %367 = vmatpush1.msra.mxu0 %v331
    %368 = vmatprep.subr.mxu0 0.0
    %369 = vmatpush1.msra.mxu0 %v330
    %370 = vmatprep.subr.mxu0 0.0
    %371 = vmatpush1.msra.mxu0 %v329
    %372 = vmatprep.subr.mxu0 0.0
    %373 = vmatpush1.msra.mxu0 %v328
    %374 = vmatprep.subr.mxu0 0.0
    %375 = vmatpush1.msra.mxu0 %v327
    %376 = vmatprep.subr.mxu0 0.0
    %377 = vmatpush1.msra.mxu0 %v326
    %378 = vmatprep.subr.mxu0 0.0
    %379 = vmatpush1.msra.mxu0 %v325
    %380 = vmatprep.subr.mxu0 0.0
    %381 = vmatpush2.msra.mxu0 0.0
    %382 = vmatprep.subr.mxu0 0.0
    %383 = vmatpush2.msra.mxu0 0.0
    %384 = vmatprep.subr.mxu0 0.0
    %385 = vmatpush2.msra.mxu0 0.0
    %386 = vmatprep.subr.mxu0 0.0
    %387 = vmatpush2.msra.mxu0 0.0
    %388 = vmatprep.subr.mxu0 0.0
    %389 = vmatpush2.msra.mxu0 0.0
    %390 = vmatprep.subr.mxu0 0.0
    %391 = vmatpush2.msra.mxu0 0.0
    %392 = vmatprep.subr.mxu0 0.0
    %393 = vmatpush2.msra.mxu0 0.0
    %394 = vmatprep.subr.mxu0 0.0
    %395 = vmatpush2.msra.mxu0 0.0
    %396 = vmatprep.subr.mxu0 0.0
    %397 = vmatpush2.msra.mxu0 0.0
    %398 = vmatprep.subr.mxu0 0.0
    %399 = vmatpush2.msra.mxu0 0.0
    %400 = vmatprep.subr.mxu0 0.0
    %401 = vmatpush2.msra.mxu0 0.0
    %402 = vmatprep.subr.mxu0 0.0
    %403 = vmatpush2.msra.mxu0 0.0
    %404 = vmatprep.subr.mxu0 0.0
    %405 = vmatpush2.msra.mxu0 0.0
    %406 = vmatprep.subr.mxu0 0.0
    %407 = vmatpush2.msra.mxu0 0.0
    %408 = vmatprep.subr.mxu0 0.0
    %409 = vmatpush2.msra.mxu0 0.0
    %410 = vmatprep.subr.mxu0 0.0
    %411 = vmatpush2.msra.mxu0 0.0
    %412 = vmatprep.mubr.f32.mxu0 0.0
    %413 = vmatmul.mubr.f32.gmra.mxu0 %v324
    %v414 = vpop.f32.mrf.mxu0
    %v415 = vadd.f32 %v346, %v414
    %v416 = vpop.f32.mrf.mxu0
    %417 = vdwg.mxu0
    %418 = vmax.xlane.f32.xlu0 %v415
    %v419 = vpop.xlane.xlu0 %418
    %v420 = vsub.f32 %v415, %v419
    %v421 = vmul.f32 %v420, 1.442695
    %v422 = vpow.pop %v421
    %423 = vadd.xlane.f32.xlu0 %v422
    %v424 = vpop.xlane.xlu0 %423
    %v425 = vlog2.pop %v424
    %v426 = vmul.f32 %v425, 0.6931472
    %v427 = vadd.f32 %v419, %v426
    %v428 = vsub.f32 %v415, %v427
    %s429 = scalar_lea.vmem %s5, 8
    %430 = vst [vmem:[%s429] sm:$0xff] %v428
    %s431 = scalar_lea.vmem %s0, 16
    %v432 = vld [vmem:[%s431] sm:$0xff]
    %v433 = vld [vmem:[%s2] sm:$0xff]
    %v434 = vld [vmem:[%s2 + $0x8] sm:$0xff]
    %v435 = vld [vmem:[%s2 + $0x10] sm:$0xff]
    %v436 = vld [vmem:[%s2 + $0x18] sm:$0xff]
    %v437 = vld [vmem:[%s2 + $0x20] sm:$0xff]
    %v438 = vld [vmem:[%s2 + $0x28] sm:$0xff]
    %v439 = vld [vmem:[%s2 + $0x30] sm:$0xff]
    %v440 = vld [vmem:[%s2 + $0x38] sm:$0xff]
    %v441 = vld [vmem:[%s2 + $0x40] sm:$0xff]
    %v442 = vld [vmem:[%s2 + $0x48] sm:$0xff]
    %v443 = vld [vmem:[%s2 + $0x50] sm:$0xff]
    %v444 = vld [vmem:[%s2 + $0x58] sm:$0xff]
    %v445 = vld [vmem:[%s2 + $0x60] sm:$0xff]
    %v446 = vld [vmem:[%s2 + $0x68] sm:$0xff]
    %v447 = vld [vmem:[%s2 + $0x70] sm:$0xff]
    %v448 = vld [vmem:[%s2 + $0x78] sm:$0xff]
    %449 = vmatprep.subr.mxu0 0.0
    %450 = vmatpush1.msra.mxu0 %v448
    %451 = vmatprep.subr.mxu0 0.0
    %452 = vmatpush1.msra.mxu0 %v447
    %453 = vmatprep.subr.mxu0 0.0
    %454 = vmatpush1.msra.mxu0 %v446
    %455 = vmatprep.subr.mxu0 0.0
    %456 = vmatpush1.msra.mxu0 %v445
    %457 = vmatprep.subr.mxu0 0.0
    %458 = vmatpush1.msra.mxu0 %v444
    %459 = vmatprep.subr.mxu0 0.0
    %460 = vmatpush1.msra.mxu0 %v443
    %461 = vmatprep.subr.mxu0 0.0
    %462 = vmatpush1.msra.mxu0 %v442
    %463 = vmatprep.subr.mxu0 0.0
    %464 = vmatpush1.msra.mxu0 %v441
    %465 = vmatprep.subr.mxu0 0.0
    %466 = vmatpush1.msra.mxu0 %v440
    %467 = vmatprep.subr.mxu0 0.0
    %468 = vmatpush1.msra.mxu0 %v439
    %469 = vmatprep.subr.mxu0 0.0
    %470 = vmatpush1.msra.mxu0 %v438
    %471 = vmatprep.subr.mxu0 0.0
    %472 = vmatpush1.msra.mxu0 %v437
    %473 = vmatprep.subr.mxu0 0.0
    %474 = vmatpush1.msra.mxu0 %v436
    %475 = vmatprep.subr.mxu0 0.0
    %476 = vmatpush1.msra.mxu0 %v435
    %477 = vmatprep.subr.mxu0 0.0
    %478 = vmatpush1.msra.mxu0 %v434
    %479 = vmatprep.subr.mxu0 0.0
    %480 = vmatpush1.msra.mxu0 %v433
    %481 = vmatprep.subr.mxu0 0.0
    %482 = vmatpush2.msra.mxu0 0.0
    %483 = vmatprep.subr.mxu0 0.0
    %484 = vmatpush2.msra.mxu0 0.0
    %485 = vmatprep.subr.mxu0 0.0
    %486 = vmatpush2.msra.mxu0 0.0
    %487 = vmatprep.subr.mxu0 0.0
    %488 = vmatpush2.msra.mxu0 0.0
    %489 = vmatprep.subr.mxu0 0.0
    %490 = vmatpush2.msra.mxu0 0.0
    %491 = vmatprep.subr.mxu0 0.0
    %492 = vmatpush2.msra.mxu0 0.0
    %493 = vmatprep.subr.mxu0 0.0
    %494 = vmatpush2.msra.mxu0 0.0
    %495 = vmatprep.subr.mxu0 0.0
    %496 = vmatpush2.msra.mxu0 0.0
    %497 = vmatprep.subr.mxu0 0.0
    %498 = vmatpush2.msra.mxu0 0.0
    %499 = vmatprep.subr.mxu0 0.0
    %500 = vmatpush2.msra.mxu0 0.0
    %501 = vmatprep.subr.mxu0 0.0
    %502 = vmatpush2.msra.mxu0 0.0
    %503 = vmatprep.subr.mxu0 0.0
    %504 = vmatpush2.msra.mxu0 0.0
    %505 = vmatprep.subr.mxu0 0.0
    %506 = vmatpush2.msra.mxu0 0.0
    %507 = vmatprep.subr.mxu0 0.0
    %508 = vmatpush2.msra.mxu0 0.0
    %509 = vmatprep.subr.mxu0 0.0
    %510 = vmatpush2.msra.mxu0 0.0
    %511 = vmatprep.subr.mxu0 0.0
    %512 = vmatpush2.msra.mxu0 0.0
    %513 = vmatprep.mubr.f32.mxu0 0.0
    %514 = vmatmul.mubr.f32.gmra.mxu0 %v324
    %v515 = vpop.f32.mrf.mxu0
    %v516 = vadd.f32 0.0, %v515
    %v517 = vpop.f32.mrf.mxu0
    %518 = vdwg.mxu0
    %v519 = vadd.f32 %v432, %v516
    %v520 = vld [vmem:[#allocation2] sm:$0xff]
    %v521 = vld [vmem:[#allocation2 + $0x8] sm:$0xff]
    %v522 = vld [vmem:[#allocation2 + $0x10] sm:$0xff]
    %v523 = vld [vmem:[#allocation2 + $0x18] sm:$0xff]
    %v524 = vld [vmem:[#allocation2 + $0x20] sm:$0xff]
    %v525 = vld [vmem:[#allocation2 + $0x28] sm:$0xff]
    %v526 = vld [vmem:[#allocation2 + $0x30] sm:$0xff]
    %v527 = vld [vmem:[#allocation2 + $0x38] sm:$0xff]
    %v528 = vld [vmem:[#allocation2 + $0x40] sm:$0xff]
    %v529 = vld [vmem:[#allocation2 + $0x48] sm:$0xff]
    %v530 = vld [vmem:[#allocation2 + $0x50] sm:$0xff]
    %v531 = vld [vmem:[#allocation2 + $0x58] sm:$0xff]
    %v532 = vld [vmem:[#allocation2 + $0x60] sm:$0xff]
    %v533 = vld [vmem:[#allocation2 + $0x68] sm:$0xff]
    %v534 = vld [vmem:[#allocation2 + $0x70] sm:$0xff]
    %v535 = vld [vmem:[#allocation2 + $0x78] sm:$0xff]
    %v536 = vld [vmem:[%s4] sm:$0x1]
    %v538 = vlaneseq
    %v539 = vshrl.u32 %v538, 7
    %v540 = vsub.s32 0, %v539
    %v541 = vrot.slane %v536, %v540
    %543 = vmatprep.subr.mxu0 0.0
    %544 = vmatpush1.msra.mxu0 %v535
    %545 = vmatprep.subr.mxu0 0.0
    %546 = vmatpush1.msra.mxu0 %v534
    %547 = vmatprep.subr.mxu0 0.0
    %548 = vmatpush1.msra.mxu0 %v533
    %549 = vmatprep.subr.mxu0 0.0
    %550 = vmatpush1.msra.mxu0 %v532
    %551 = vmatprep.subr.mxu0 0.0
    %552 = vmatpush1.msra.mxu0 %v531
    %553 = vmatprep.subr.mxu0 0.0
    %554 = vmatpush1.msra.mxu0 %v530
    %555 = vmatprep.subr.mxu0 0.0
    %556 = vmatpush1.msra.mxu0 %v529
    %557 = vmatprep.subr.mxu0 0.0
    %558 = vmatpush1.msra.mxu0 %v528
    %559 = vmatprep.subr.mxu0 0.0
    %560 = vmatpush1.msra.mxu0 %v527
    %561 = vmatprep.subr.mxu0 0.0
    %562 = vmatpush1.msra.mxu0 %v526
    %563 = vmatprep.subr.mxu0 0.0
    %564 = vmatpush1.msra.mxu0 %v525
    %565 = vmatprep.subr.mxu0 0.0
    %566 = vmatpush1.msra.mxu0 %v524
    %567 = vmatprep.subr.mxu0 0.0
    %568 = vmatpush1.msra.mxu0 %v523
    %569 = vmatprep.subr.mxu0 0.0
    %570 = vmatpush1.msra.mxu0 %v522
    %571 = vmatprep.subr.mxu0 0.0
    %572 = vmatpush1.msra.mxu0 %v521
    %573 = vmatprep.subr.mxu0 0.0
    %574 = vmatpush1.msra.mxu0 %v520
    %575 = vmatprep.subr.mxu0 0.0
    %576 = vmatpush2.msra.mxu0 0.0
    %577 = vmatprep.subr.mxu0 0.0
    %578 = vmatpush2.msra.mxu0 0.0
    %579 = vmatprep.subr.mxu0 0.0
    %580 = vmatpush2.msra.mxu0 0.0
    %581 = vmatprep.subr.mxu0 0.0
    %582 = vmatpush2.msra.mxu0 0.0
    %583 = vmatprep.subr.mxu0 0.0
    %584 = vmatpush2.msra.mxu0 0.0
    %585 = vmatprep.subr.mxu0 0.0
    %586 = vmatpush2.msra.mxu0 0.0
    %587 = vmatprep.subr.mxu0 0.0
    %588 = vmatpush2.msra.mxu0 0.0
    %589 = vmatprep.subr.mxu0 0.0
    %590 = vmatpush2.msra.mxu0 0.0
    %591 = vmatprep.subr.mxu0 0.0
    %592 = vmatpush2.msra.mxu0 0.0
    %593 = vmatprep.subr.mxu0 0.0
    %594 = vmatpush2.msra.mxu0 0.0
    %595 = vmatprep.subr.mxu0 0.0
    %596 = vmatpush2.msra.mxu0 0.0
    %597 = vmatprep.subr.mxu0 0.0
    %598 = vmatpush2.msra.mxu0 0.0
    %599 = vmatprep.subr.mxu0 0.0
    %600 = vmatpush2.msra.mxu0 0.0
    %601 = vmatprep.subr.mxu0 0.0
    %602 = vmatpush2.msra.mxu0 0.0
    %603 = vmatprep.subr.mxu0 0.0
    %604 = vmatpush2.msra.mxu0 0.0
    %605 = vmatprep.subr.mxu0 0.0
    %606 = vmatpush2.msra.mxu0 0.0
    %607 = vmatprep.mubr.f32.mxu0 0.0
    %608 = vmatmul.mubr.f32.gmra.mxu0 %v519
    %v609 = vpop.f32.mrf.mxu0
    %v610 = vadd.f32 %v541, %v609
    %v611 = vpop.f32.mrf.mxu0
    %612 = vdwg.mxu0
    %613 = vmax.xlane.f32.xlu0 %v610
    %v614 = vpop.xlane.xlu0 %613
    %v615 = vsub.f32 %v610, %v614
    %v616 = vmul.f32 %v615, 1.442695
    %v617 = vpow.pop %v616
    %618 = vadd.xlane.f32.xlu0 %v617
    %v619 = vpop.xlane.xlu0 %618
    %v620 = vlog2.pop %v619
    %v621 = vmul.f32 %v620, 0.6931472
    %v622 = vadd.f32 %v614, %v621
    %v623 = vsub.f32 %v610, %v622
    %s624 = scalar_lea.vmem %s5, 16
    %625 = vst [vmem:[%s624] sm:$0xff] %v623
    %s626 = scalar_lea.vmem %s0, 24
    %v627 = vld [vmem:[%s626] sm:$0xff]
    %v628 = vld [vmem:[%s2] sm:$0xff]
    %v629 = vld [vmem:[%s2 + $0x8] sm:$0xff]
    %v630 = vld [vmem:[%s2 + $0x10] sm:$0xff]
    %v631 = vld [vmem:[%s2 + $0x18] sm:$0xff]
    %v632 = vld [vmem:[%s2 + $0x20] sm:$0xff]
    %v633 = vld [vmem:[%s2 + $0x28] sm:$0xff]
    %v634 = vld [vmem:[%s2 + $0x30] sm:$0xff]
    %v635 = vld [vmem:[%s2 + $0x38] sm:$0xff]
    %v636 = vld [vmem:[%s2 + $0x40] sm:$0xff]
    %v637 = vld [vmem:[%s2 + $0x48] sm:$0xff]
    %v638 = vld [vmem:[%s2 + $0x50] sm:$0xff]
    %v639 = vld [vmem:[%s2 + $0x58] sm:$0xff]
    %v640 = vld [vmem:[%s2 + $0x60] sm:$0xff]
    %v641 = vld [vmem:[%s2 + $0x68] sm:$0xff]
    %v642 = vld [vmem:[%s2 + $0x70] sm:$0xff]
    %v643 = vld [vmem:[%s2 + $0x78] sm:$0xff]
    %644 = vmatprep.subr.mxu0 0.0
    %645 = vmatpush1.msra.mxu0 %v643
    %646 = vmatprep.subr.mxu0 0.0
    %647 = vmatpush1.msra.mxu0 %v642
    %648 = vmatprep.subr.mxu0 0.0
    %649 = vmatpush1.msra.mxu0 %v641
    %650 = vmatprep.subr.mxu0 0.0
    %651 = vmatpush1.msra.mxu0 %v640
    %652 = vmatprep.subr.mxu0 0.0
    %653 = vmatpush1.msra.mxu0 %v639
    %654 = vmatprep.subr.mxu0 0.0
    %655 = vmatpush1.msra.mxu0 %v638
    %656 = vmatprep.subr.mxu0 0.0
    %657 = vmatpush1.msra.mxu0 %v637
    %658 = vmatprep.subr.mxu0 0.0
    %659 = vmatpush1.msra.mxu0 %v636
    %660 = vmatprep.subr.mxu0 0.0
    %661 = vmatpush1.msra.mxu0 %v635
    %662 = vmatprep.subr.mxu0 0.0
    %663 = vmatpush1.msra.mxu0 %v634
    %664 = vmatprep.subr.mxu0 0.0
    %665 = vmatpush1.msra.mxu0 %v633
    %666 = vmatprep.subr.mxu0 0.0
    %667 = vmatpush1.msra.mxu0 %v632
    %668 = vmatprep.subr.mxu0 0.0
    %669 = vmatpush1.msra.mxu0 %v631
    %670 = vmatprep.subr.mxu0 0.0
    %671 = vmatpush1.msra.mxu0 %v630
    %672 = vmatprep.subr.mxu0 0.0
    %673 = vmatpush1.msra.mxu0 %v629
    %674 = vmatprep.subr.mxu0 0.0
    %675 = vmatpush1.msra.mxu0 %v628
    %676 = vmatprep.subr.mxu0 0.0
    %677 = vmatpush2.msra.mxu0 0.0
    %678 = vmatprep.subr.mxu0 0.0
    %679 = vmatpush2.msra.mxu0 0.0
    %680 = vmatprep.subr.mxu0 0.0
    %681 = vmatpush2.msra.mxu0 0.0
    %682 = vmatprep.subr.mxu0 0.0
    %683 = vmatpush2.msra.mxu0 0.0
    %684 = vmatprep.subr.mxu0 0.0
    %685 = vmatpush2.msra.mxu0 0.0
    %686 = vmatprep.subr.mxu0 0.0
    %687 = vmatpush2.msra.mxu0 0.0
    %688 = vmatprep.subr.mxu0 0.0
    %689 = vmatpush2.msra.mxu0 0.0
    %690 = vmatprep.subr.mxu0 0.0
    %691 = vmatpush2.msra.mxu0 0.0
    %692 = vmatprep.subr.mxu0 0.0
    %693 = vmatpush2.msra.mxu0 0.0
    %694 = vmatprep.subr.mxu0 0.0
    %695 = vmatpush2.msra.mxu0 0.0
    %696 = vmatprep.subr.mxu0 0.0
    %697 = vmatpush2.msra.mxu0 0.0
    %698 = vmatprep.subr.mxu0 0.0
    %699 = vmatpush2.msra.mxu0 0.0
    %700 = vmatprep.subr.mxu0 0.0
    %701 = vmatpush2.msra.mxu0 0.0
    %702 = vmatprep.subr.mxu0 0.0
    %703 = vmatpush2.msra.mxu0 0.0
    %704 = vmatprep.subr.mxu0 0.0
    %705 = vmatpush2.msra.mxu0 0.0
    %706 = vmatprep.subr.mxu0 0.0
    %707 = vmatpush2.msra.mxu0 0.0
    %708 = vmatprep.mubr.f32.mxu0 0.0
    %709 = vmatmul.mubr.f32.gmra.mxu0 %v519
    %v710 = vpop.f32.mrf.mxu0
    %v711 = vadd.f32 0.0, %v710
    %v712 = vpop.f32.mrf.mxu0
    %713 = vdwg.mxu0
    %v714 = vadd.f32 %v627, %v711
    %v715 = vld [vmem:[#allocation2] sm:$0xff]
    %v716 = vld [vmem:[#allocation2 + $0x8] sm:$0xff]
    %v717 = vld [vmem:[#allocation2 + $0x10] sm:$0xff]
    %v718 = vld [vmem:[#allocation2 + $0x18] sm:$0xff]
    %v719 = vld [vmem:[#allocation2 + $0x20] sm:$0xff]
    %v720 = vld [vmem:[#allocation2 + $0x28] sm:$0xff]
    %v721 = vld [vmem:[#allocation2 + $0x30] sm:$0xff]
    %v722 = vld [vmem:[#allocation2 + $0x38] sm:$0xff]
    %v723 = vld [vmem:[#allocation2 + $0x40] sm:$0xff]
    %v724 = vld [vmem:[#allocation2 + $0x48] sm:$0xff]
    %v725 = vld [vmem:[#allocation2 + $0x50] sm:$0xff]
    %v726 = vld [vmem:[#allocation2 + $0x58] sm:$0xff]
    %v727 = vld [vmem:[#allocation2 + $0x60] sm:$0xff]
    %v728 = vld [vmem:[#allocation2 + $0x68] sm:$0xff]
    %v729 = vld [vmem:[#allocation2 + $0x70] sm:$0xff]
    %v730 = vld [vmem:[#allocation2 + $0x78] sm:$0xff]
    %v731 = vld [vmem:[%s4] sm:$0x1]
    %v733 = vlaneseq
    %v734 = vshrl.u32 %v733, 7
    %v735 = vsub.s32 0, %v734
    %v736 = vrot.slane %v731, %v735
    %738 = vmatprep.subr.mxu0 0.0
    %739 = vmatpush1.msra.mxu0 %v730
    %740 = vmatprep.subr.mxu0 0.0
    %741 = vmatpush1.msra.mxu0 %v729
    %742 = vmatprep.subr.mxu0 0.0
    %743 = vmatpush1.msra.mxu0 %v728
    %744 = vmatprep.subr.mxu0 0.0
    %745 = vmatpush1.msra.mxu0 %v727
    %746 = vmatprep.subr.mxu0 0.0
    %747 = vmatpush1.msra.mxu0 %v726
    %748 = vmatprep.subr.mxu0 0.0
    %749 = vmatpush1.msra.mxu0 %v725
    %750 = vmatprep.subr.mxu0 0.0
    %751 = vmatpush1.msra.mxu0 %v724
    %752 = vmatprep.subr.mxu0 0.0
    %753 = vmatpush1.msra.mxu0 %v723
    %754 = vmatprep.subr.mxu0 0.0
    %755 = vmatpush1.msra.mxu0 %v722
    %756 = vmatprep.subr.mxu0 0.0
    %757 = vmatpush1.msra.mxu0 %v721
    %758 = vmatprep.subr.mxu0 0.0
    %759 = vmatpush1.msra.mxu0 %v720
    %760 = vmatprep.subr.mxu0 0.0
    %761 = vmatpush1.msra.mxu0 %v719
    %762 = vmatprep.subr.mxu0 0.0
    %763 = vmatpush1.msra.mxu0 %v718
    %764 = vmatprep.subr.mxu0 0.0
    %765 = vmatpush1.msra.mxu0 %v717
    %766 = vmatprep.subr.mxu0 0.0
    %767 = vmatpush1.msra.mxu0 %v716
    %768 = vmatprep.subr.mxu0 0.0
    %769 = vmatpush1.msra.mxu0 %v715
    %770 = vmatprep.subr.mxu0 0.0
    %771 = vmatpush2.msra.mxu0 0.0
    %772 = vmatprep.subr.mxu0 0.0
    %773 = vmatpush2.msra.mxu0 0.0
    %774 = vmatprep.subr.mxu0 0.0
    %775 = vmatpush2.msra.mxu0 0.0
    %776 = vmatprep.subr.mxu0 0.0
    %777 = vmatpush2.msra.mxu0 0.0
    %778 = vmatprep.subr.mxu0 0.0
    %779 = vmatpush2.msra.mxu0 0.0
    %780 = vmatprep.subr.mxu0 0.0
    %781 = vmatpush2.msra.mxu0 0.0
    %782 = vmatprep.subr.mxu0 0.0
    %783 = vmatpush2.msra.mxu0 0.0
    %784 = vmatprep.subr.mxu0 0.0
    %785 = vmatpush2.msra.mxu0 0.0
    %786 = vmatprep.subr.mxu0 0.0
    %787 = vmatpush2.msra.mxu0 0.0
    %788 = vmatprep.subr.mxu0 0.0
    %789 = vmatpush2.msra.mxu0 0.0
    %790 = vmatprep.subr.mxu0 0.0
    %791 = vmatpush2.msra.mxu0 0.0
    %792 = vmatprep.subr.mxu0 0.0
    %793 = vmatpush2.msra.mxu0 0.0
    %794 = vmatprep.subr.mxu0 0.0
    %795 = vmatpush2.msra.mxu0 0.0
    %796 = vmatprep.subr.mxu0 0.0
    %797 = vmatpush2.msra.mxu0 0.0
    %798 = vmatprep.subr.mxu0 0.0
    %799 = vmatpush2.msra.mxu0 0.0
    %800 = vmatprep.subr.mxu0 0.0
    %801 = vmatpush2.msra.mxu0 0.0
    %802 = vmatprep.mubr.f32.mxu0 0.0
    %803 = vmatmul.mubr.f32.gmra.mxu0 %v714
    %v804 = vpop.f32.mrf.mxu0
    %v805 = vadd.f32 %v736, %v804
    %v806 = vpop.f32.mrf.mxu0
    %807 = vdwg.mxu0
    %808 = vmax.xlane.f32.xlu0 %v805
    %v809 = vpop.xlane.xlu0 %808
    %v810 = vsub.f32 %v805, %v809
    %v811 = vmul.f32 %v810, 1.442695
    %v812 = vpow.pop %v811
    %813 = vadd.xlane.f32.xlu0 %v812
    %v814 = vpop.xlane.xlu0 %813
    %v815 = vlog2.pop %v814
    %v816 = vmul.f32 %v815, 0.6931472
    %v817 = vadd.f32 %v809, %v816
    %v818 = vsub.f32 %v805, %v817
    %s819 = scalar_lea.vmem %s5, 24
    %820 = vst [vmem:[%s819] sm:$0xff] %v818
    %s821 = scalar_lea.vmem %s0, 32
    %v822 = vld [vmem:[%s821] sm:$0xff]
    %v823 = vld [vmem:[%s2] sm:$0xff]
    %v824 = vld [vmem:[%s2 + $0x8] sm:$0xff]
    %v825 = vld [vmem:[%s2 + $0x10] sm:$0xff]
    %v826 = vld [vmem:[%s2 + $0x18] sm:$0xff]
    %v827 = vld [vmem:[%s2 + $0x20] sm:$0xff]
    %v828 = vld [vmem:[%s2 + $0x28] sm:$0xff]
    %v829 = vld [vmem:[%s2 + $0x30] sm:$0xff]
    %v830 = vld [vmem:[%s2 + $0x38] sm:$0xff]
    %v831 = vld [vmem:[%s2 + $0x40] sm:$0xff]
    %v832 = vld [vmem:[%s2 + $0x48] sm:$0xff]
    %v833 = vld [vmem:[%s2 + $0x50] sm:$0xff]
    %v834 = vld [vmem:[%s2 + $0x58] sm:$0xff]
    %v835 = vld [vmem:[%s2 + $0x60] sm:$0xff]
    %v836 = vld [vmem:[%s2 + $0x68] sm:$0xff]
    %v837 = vld [vmem:[%s2 + $0x70] sm:$0xff]
    %v838 = vld [vmem:[%s2 + $0x78] sm:$0xff]
    %839 = vmatprep.subr.mxu0 0.0
    %840 = vmatpush1.msra.mxu0 %v838
    %841 = vmatprep.subr.mxu0 0.0
    %842 = vmatpush1.msra.mxu0 %v837
    %843 = vmatprep.subr.mxu0 0.0
    %844 = vmatpush1.msra.mxu0 %v836
    %845 = vmatprep.subr.mxu0 0.0
    %846 = vmatpush1.msra.mxu0 %v835
    %847 = vmatprep.subr.mxu0 0.0
    %848 = vmatpush1.msra.mxu0 %v834
    %849 = vmatprep.subr.mxu0 0.0
    %850 = vmatpush1.msra.mxu0 %v833
    %851 = vmatprep.subr.mxu0 0.0
    %852 = vmatpush1.msra.mxu0 %v832
    %853 = vmatprep.subr.mxu0 0.0
    %854 = vmatpush1.msra.mxu0 %v831
    %855 = vmatprep.subr.mxu0 0.0
    %856 = vmatpush1.msra.mxu0 %v830
    %857 = vmatprep.subr.mxu0 0.0
    %858 = vmatpush1.msra.mxu0 %v829
    %859 = vmatprep.subr.mxu0 0.0
    %860 = vmatpush1.msra.mxu0 %v828
    %861 = vmatprep.subr.mxu0 0.0
    %862 = vmatpush1.msra.mxu0 %v827
    %863 = vmatprep.subr.mxu0 0.0
    %864 = vmatpush1.msra.mxu0 %v826
    %865 = vmatprep.subr.mxu0 0.0
    %866 = vmatpush1.msra.mxu0 %v825
    %867 = vmatprep.subr.mxu0 0.0
    %868 = vmatpush1.msra.mxu0 %v824
    %869 = vmatprep.subr.mxu0 0.0
    %870 = vmatpush1.msra.mxu0 %v823
    %871 = vmatprep.subr.mxu0 0.0
    %872 = vmatpush2.msra.mxu0 0.0
    %873 = vmatprep.subr.mxu0 0.0
    %874 = vmatpush2.msra.mxu0 0.0
    %875 = vmatprep.subr.mxu0 0.0
    %876 = vmatpush2.msra.mxu0 0.0
    %877 = vmatprep.subr.mxu0 0.0
    %878 = vmatpush2.msra.mxu0 0.0
    %879 = vmatprep.subr.mxu0 0.0
    %880 = vmatpush2.msra.mxu0 0.0
    %881 = vmatprep.subr.mxu0 0.0
    %882 = vmatpush2.msra.mxu0 0.0
    %883 = vmatprep.subr.mxu0 0.0
    %884 = vmatpush2.msra.mxu0 0.0
    %885 = vmatprep.subr.mxu0 0.0
    %886 = vmatpush2.msra.mxu0 0.0
    %887 = vmatprep.subr.mxu0 0.0
    %888 = vmatpush2.msra.mxu0 0.0
    %889 = vmatprep.subr.mxu0 0.0
    %890 = vmatpush2.msra.mxu0 0.0
    %891 = vmatprep.subr.mxu0 0.0
    %892 = vmatpush2.msra.mxu0 0.0
    %893 = vmatprep.subr.mxu0 0.0
    %894 = vmatpush2.msra.mxu0 0.0
    %895 = vmatprep.subr.mxu0 0.0
    %896 = vmatpush2.msra.mxu0 0.0
    %897 = vmatprep.subr.mxu0 0.0
    %898 = vmatpush2.msra.mxu0 0.0
    %899 = vmatprep.subr.mxu0 0.0
    %900 = vmatpush2.msra.mxu0 0.0
    %901 = vmatprep.subr.mxu0 0.0
    %902 = vmatpush2.msra.mxu0 0.0
    %903 = vmatprep.mubr.f32.mxu0 0.0
    %904 = vmatmul.mubr.f32.gmra.mxu0 %v714
    %v905 = vpop.f32.mrf.mxu0
    %v906 = vadd.f32 0.0, %v905
    %v907 = vpop.f32.mrf.mxu0
    %908 = vdwg.mxu0
    %v909 = vadd.f32 %v822, %v906
    %v910 = vld [vmem:[#allocation2] sm:$0xff]
    %v911 = vld [vmem:[#allocation2 + $0x8] sm:$0xff]
    %v912 = vld [vmem:[#allocation2 + $0x10] sm:$0xff]
    %v913 = vld [vmem:[#allocation2 + $0x18] sm:$0xff]
    %v914 = vld [vmem:[#allocation2 + $0x20] sm:$0xff]
    %v915 = vld [vmem:[#allocation2 + $0x28] sm:$0xff]
    %v916 = vld [vmem:[#allocation2 + $0x30] sm:$0xff]
    %v917 = vld [vmem:[#allocation2 + $0x38] sm:$0xff]
    %v918 = vld [vmem:[#allocation2 + $0x40] sm:$0xff]
    %v919 = vld [vmem:[#allocation2 + $0x48] sm:$0xff]
    %v920 = vld [vmem:[#allocation2 + $0x50] sm:$0xff]
    %v921 = vld [vmem:[#allocation2 + $0x58] sm:$0xff]
    %v922 = vld [vmem:[#allocation2 + $0x60] sm:$0xff]
    %v923 = vld [vmem:[#allocation2 + $0x68] sm:$0xff]
    %v924 = vld [vmem:[#allocation2 + $0x70] sm:$0xff]
    %v925 = vld [vmem:[#allocation2 + $0x78] sm:$0xff]
    %v926 = vld [vmem:[%s4] sm:$0x1]
    %v928 = vlaneseq
    %v929 = vshrl.u32 %v928, 7
    %v930 = vsub.s32 0, %v929
    %v931 = vrot.slane %v926, %v930
    %933 = vmatprep.subr.mxu0 0.0
    %934 = vmatpush1.msra.mxu0 %v925
    %935 = vmatprep.subr.mxu0 0.0
    %936 = vmatpush1.msra.mxu0 %v924
    %937 = vmatprep.subr.mxu0 0.0
    %938 = vmatpush1.msra.mxu0 %v923
    %939 = vmatprep.subr.mxu0 0.0
    %940 = vmatpush1.msra.mxu0 %v922
    %941 = vmatprep.subr.mxu0 0.0
    %942 = vmatpush1.msra.mxu0 %v921
    %943 = vmatprep.subr.mxu0 0.0
    %944 = vmatpush1.msra.mxu0 %v920
    %945 = vmatprep.subr.mxu0 0.0
    %946 = vmatpush1.msra.mxu0 %v919
    %947 = vmatprep.subr.mxu0 0.0
    %948 = vmatpush1.msra.mxu0 %v918
    %949 = vmatprep.subr.mxu0 0.0
    %950 = vmatpush1.msra.mxu0 %v917
    %951 = vmatprep.subr.mxu0 0.0
    %952 = vmatpush1.msra.mxu0 %v916
    %953 = vmatprep.subr.mxu0 0.0
    %954 = vmatpush1.msra.mxu0 %v915
    %955 = vmatprep.subr.mxu0 0.0
    %956 = vmatpush1.msra.mxu0 %v914
    %957 = vmatprep.subr.mxu0 0.0
    %958 = vmatpush1.msra.mxu0 %v913
    %959 = vmatprep.subr.mxu0 0.0
    %960 = vmatpush1.msra.mxu0 %v912
    %961 = vmatprep.subr.mxu0 0.0
    %962 = vmatpush1.msra.mxu0 %v911
    %963 = vmatprep.subr.mxu0 0.0
    %964 = vmatpush1.msra.mxu0 %v910
    %965 = vmatprep.subr.mxu0 0.0
    %966 = vmatpush2.msra.mxu0 0.0
    %967 = vmatprep.subr.mxu0 0.0
    %968 = vmatpush2.msra.mxu0 0.0
    %969 = vmatprep.subr.mxu0 0.0
    %970 = vmatpush2.msra.mxu0 0.0
    %971 = vmatprep.subr.mxu0 0.0
    %972 = vmatpush2.msra.mxu0 0.0
    %973 = vmatprep.subr.mxu0 0.0
    %974 = vmatpush2.msra.mxu0 0.0
    %975 = vmatprep.subr.mxu0 0.0
    %976 = vmatpush2.msra.mxu0 0.0
    %977 = vmatprep.subr.mxu0 0.0
    %978 = vmatpush2.msra.mxu0 0.0
    %979 = vmatprep.subr.mxu0 0.0
    %980 = vmatpush2.msra.mxu0 0.0
    %981 = vmatprep.subr.mxu0 0.0
    %982 = vmatpush2.msra.mxu0 0.0
    %983 = vmatprep.subr.mxu0 0.0
    %984 = vmatpush2.msra.mxu0 0.0
    %985 = vmatprep.subr.mxu0 0.0
    %986 = vmatpush2.msra.mxu0 0.0
    %987 = vmatprep.subr.mxu0 0.0
    %988 = vmatpush2.msra.mxu0 0.0
    %989 = vmatprep.subr.mxu0 0.0
    %990 = vmatpush2.msra.mxu0 0.0
    %991 = vmatprep.subr.mxu0 0.0
    %992 = vmatpush2.msra.mxu0 0.0
    %993 = vmatprep.subr.mxu0 0.0
    %994 = vmatpush2.msra.mxu0 0.0
    %995 = vmatprep.subr.mxu0 0.0
    %996 = vmatpush2.msra.mxu0 0.0
    %997 = vmatprep.mubr.f32.mxu0 0.0
    %998 = vmatmul.mubr.f32.gmra.mxu0 %v909
    %v999 = vpop.f32.mrf.mxu0
    %v1000 = vadd.f32 %v931, %v999
    %v1001 = vpop.f32.mrf.mxu0
    %1002 = vdwg.mxu0
    %1003 = vmax.xlane.f32.xlu0 %v1000
    %v1004 = vpop.xlane.xlu0 %1003
    %v1005 = vsub.f32 %v1000, %v1004
    %v1006 = vmul.f32 %v1005, 1.442695
    %v1007 = vpow.pop %v1006
    %1008 = vadd.xlane.f32.xlu0 %v1007
    %v1009 = vpop.xlane.xlu0 %1008
    %v1010 = vlog2.pop %v1009
    %v1011 = vmul.f32 %v1010, 0.6931472
    %v1012 = vadd.f32 %v1004, %v1011
    %v1013 = vsub.f32 %v1000, %v1012
    %s1014 = scalar_lea.vmem %s5, 32
    %1015 = vst [vmem:[%s1014] sm:$0xff] %v1013
    %s1016 = scalar_lea.vmem %s0, 40
    %v1017 = vld [vmem:[%s1016] sm:$0xff]
    %v1018 = vld [vmem:[%s2] sm:$0xff]
    %v1019 = vld [vmem:[%s2 + $0x8] sm:$0xff]
    %v1020 = vld [vmem:[%s2 + $0x10] sm:$0xff]
    %v1021 = vld [vmem:[%s2 + $0x18] sm:$0xff]
    %v1022 = vld [vmem:[%s2 + $0x20] sm:$0xff]
    %v1023 = vld [vmem:[%s2 + $0x28] sm:$0xff]
    %v1024 = vld [vmem:[%s2 + $0x30] sm:$0xff]
    %v1025 = vld [vmem:[%s2 + $0x38] sm:$0xff]
    %v1026 = vld [vmem:[%s2 + $0x40] sm:$0xff]
    %v1027 = vld [vmem:[%s2 + $0x48] sm:$0xff]
    %v1028 = vld [vmem:[%s2 + $0x50] sm:$0xff]
    %v1029 = vld [vmem:[%s2 + $0x58] sm:$0xff]
    %v1030 = vld [vmem:[%s2 + $0x60] sm:$0xff]
    %v1031 = vld [vmem:[%s2 + $0x68] sm:$0xff]
    %v1032 = vld [vmem:[%s2 + $0x70] sm:$0xff]
    %v1033 = vld [vmem:[%s2 + $0x78] sm:$0xff]
    %1034 = vmatprep.subr.mxu0 0.0
    %1035 = vmatpush1.msra.mxu0 %v1033
    %1036 = vmatprep.subr.mxu0 0.0
    %1037 = vmatpush1.msra.mxu0 %v1032
    %1038 = vmatprep.subr.mxu0 0.0
    %1039 = vmatpush1.msra.mxu0 %v1031
    %1040 = vmatprep.subr.mxu0 0.0
    %1041 = vmatpush1.msra.mxu0 %v1030
    %1042 = vmatprep.subr.mxu0 0.0
    %1043 = vmatpush1.msra.mxu0 %v1029
    %1044 = vmatprep.subr.mxu0 0.0
    %1045 = vmatpush1.msra.mxu0 %v1028
    %1046 = vmatprep.subr.mxu0 0.0
    %1047 = vmatpush1.msra.mxu0 %v1027
    %1048 = vmatprep.subr.mxu0 0.0
    %1049 = vmatpush1.msra.mxu0 %v1026
    %1050 = vmatprep.subr.mxu0 0.0
    %1051 = vmatpush1.msra.mxu0 %v1025
    %1052 = vmatprep.subr.mxu0 0.0
    %1053 = vmatpush1.msra.mxu0 %v1024
    %1054 = vmatprep.subr.mxu0 0.0
    %1055 = vmatpush1.msra.mxu0 %v1023
    %1056 = vmatprep.subr.mxu0 0.0
    %1057 = vmatpush1.msra.mxu0 %v1022
    %1058 = vmatprep.subr.mxu0 0.0
    %1059 = vmatpush1.msra.mxu0 %v1021
    %1060 = vmatprep.subr.mxu0 0.0
    %1061 = vmatpush1.msra.mxu0 %v1020
    %1062 = vmatprep.subr.mxu0 0.0
    %1063 = vmatpush1.msra.mxu0 %v1019
    %1064 = vmatprep.subr.mxu0 0.0
    %1065 = vmatpush1.msra.mxu0 %v1018
    %1066 = vmatprep.subr.mxu0 0.0
    %1067 = vmatpush2.msra.mxu0 0.0
    %1068 = vmatprep.subr.mxu0 0.0
    %1069 = vmatpush2.msra.mxu0 0.0
    %1070 = vmatprep.subr.mxu0 0.0
    %1071 = vmatpush2.msra.mxu0 0.0
    %1072 = vmatprep.subr.mxu0 0.0
    %1073 = vmatpush2.msra.mxu0 0.0
    %1074 = vmatprep.subr.mxu0 0.0
    %1075 = vmatpush2.msra.mxu0 0.0
    %1076 = vmatprep.subr.mxu0 0.0
    %1077 = vmatpush2.msra.mxu0 0.0
    %1078 = vmatprep.subr.mxu0 0.0
    %1079 = vmatpush2.msra.mxu0 0.0
    %1080 = vmatprep.subr.mxu0 0.0
    %1081 = vmatpush2.msra.mxu0 0.0
    %1082 = vmatprep.subr.mxu0 0.0
    %1083 = vmatpush2.msra.mxu0 0.0
    %1084 = vmatprep.subr.mxu0 0.0
    %1085 = vmatpush2.msra.mxu0 0.0
    %1086 = vmatprep.subr.mxu0 0.0
    %1087 = vmatpush2.msra.mxu0 0.0
    %1088 = vmatprep.subr.mxu0 0.0
    %1089 = vmatpush2.msra.mxu0 0.0
    %1090 = vmatprep.subr.mxu0 0.0
    %1091 = vmatpush2.msra.mxu0 0.0
    %1092 = vmatprep.subr.mxu0 0.0
    %1093 = vmatpush2.msra.mxu0 0.0
    %1094 = vmatprep.subr.mxu0 0.0
    %1095 = vmatpush2.msra.mxu0 0.0
    %1096 = vmatprep.subr.mxu0 0.0
    %1097 = vmatpush2.msra.mxu0 0.0
    %1098 = vmatprep.mubr.f32.mxu0 0.0
    %1099 = vmatmul.mubr.f32.gmra.mxu0 %v909
    %v1100 = vpop.f32.mrf.mxu0
    %v1101 = vadd.f32 0.0, %v1100
    %v1102 = vpop.f32.mrf.mxu0
    %1103 = vdwg.mxu0
    %v1104 = vadd.f32 %v1017, %v1101
    %v1105 = vld [vmem:[#allocation2] sm:$0xff]
    %v1106 = vld [vmem:[#allocation2 + $0x8] sm:$0xff]
    %v1107 = vld [vmem:[#allocation2 + $0x10] sm:$0xff]
    %v1108 = vld [vmem:[#allocation2 + $0x18] sm:$0xff]
    %v1109 = vld [vmem:[#allocation2 + $0x20] sm:$0xff]
    %v1110 = vld [vmem:[#allocation2 + $0x28] sm:$0xff]
    %v1111 = vld [vmem:[#allocation2 + $0x30] sm:$0xff]
    %v1112 = vld [vmem:[#allocation2 + $0x38] sm:$0xff]
    %v1113 = vld [vmem:[#allocation2 + $0x40] sm:$0xff]
    %v1114 = vld [vmem:[#allocation2 + $0x48] sm:$0xff]
    %v1115 = vld [vmem:[#allocation2 + $0x50] sm:$0xff]
    %v1116 = vld [vmem:[#allocation2 + $0x58] sm:$0xff]
    %v1117 = vld [vmem:[#allocation2 + $0x60] sm:$0xff]
    %v1118 = vld [vmem:[#allocation2 + $0x68] sm:$0xff]
    %v1119 = vld [vmem:[#allocation2 + $0x70] sm:$0xff]
    %v1120 = vld [vmem:[#allocation2 + $0x78] sm:$0xff]
    %v1121 = vld [vmem:[%s4] sm:$0x1]
    %v1123 = vlaneseq
    %v1124 = vshrl.u32 %v1123, 7
    %v1125 = vsub.s32 0, %v1124
    %v1126 = vrot.slane %v1121, %v1125
    %1128 = vmatprep.subr.mxu0 0.0
    %1129 = vmatpush1.msra.mxu0 %v1120
    %1130 = vmatprep.subr.mxu0 0.0
    %1131 = vmatpush1.msra.mxu0 %v1119
    %1132 = vmatprep.subr.mxu0 0.0
    %1133 = vmatpush1.msra.mxu0 %v1118
    %1134 = vmatprep.subr.mxu0 0.0
    %1135 = vmatpush1.msra.mxu0 %v1117
    %1136 = vmatprep.subr.mxu0 0.0
    %1137 = vmatpush1.msra.mxu0 %v1116
    %1138 = vmatprep.subr.mxu0 0.0
    %1139 = vmatpush1.msra.mxu0 %v1115
    %1140 = vmatprep.subr.mxu0 0.0
    %1141 = vmatpush1.msra.mxu0 %v1114
    %1142 = vmatprep.subr.mxu0 0.0
    %1143 = vmatpush1.msra.mxu0 %v1113
    %1144 = vmatprep.subr.mxu0 0.0
    %1145 = vmatpush1.msra.mxu0 %v1112
    %1146 = vmatprep.subr.mxu0 0.0
    %1147 = vmatpush1.msra.mxu0 %v1111
    %1148 = vmatprep.subr.mxu0 0.0
    %1149 = vmatpush1.msra.mxu0 %v1110
    %1150 = vmatprep.subr.mxu0 0.0
    %1151 = vmatpush1.msra.mxu0 %v1109
    %1152 = vmatprep.subr.mxu0 0.0
    %1153 = vmatpush1.msra.mxu0 %v1108
    %1154 = vmatprep.subr.mxu0 0.0
    %1155 = vmatpush1.msra.mxu0 %v1107
    %1156 = vmatprep.subr.mxu0 0.0
    %1157 = vmatpush1.msra.mxu0 %v1106
    %1158 = vmatprep.subr.mxu0 0.0
    %1159 = vmatpush1.msra.mxu0 %v1105
    %1160 = vmatprep.subr.mxu0 0.0
    %1161 = vmatpush2.msra.mxu0 0.0
    %1162 = vmatprep.subr.mxu0 0.0
    %1163 = vmatpush2.msra.mxu0 0.0
    %1164 = vmatprep.subr.mxu0 0.0
    %1165 = vmatpush2.msra.mxu0 0.0
    %1166 = vmatprep.subr.mxu0 0.0
    %1167 = vmatpush2.msra.mxu0 0.0
    %1168 = vmatprep.subr.mxu0 0.0
    %1169 = vmatpush2.msra.mxu0 0.0
    %1170 = vmatprep.subr.mxu0 0.0
    %1171 = vmatpush2.msra.mxu0 0.0
    %1172 = vmatprep.subr.mxu0 0.0
    %1173 = vmatpush2.msra.mxu0 0.0
    %1174 = vmatprep.subr.mxu0 0.0
    %1175 = vmatpush2.msra.mxu0 0.0
    %1176 = vmatprep.subr.mxu0 0.0
    %1177 = vmatpush2.msra.mxu0 0.0
    %1178 = vmatprep.subr.mxu0 0.0
    %1179 = vmatpush2.msra.mxu0 0.0
    %1180 = vmatprep.subr.mxu0 0.0
    %1181 = vmatpush2.msra.mxu0 0.0
    %1182 = vmatprep.subr.mxu0 0.0
    %1183 = vmatpush2.msra.mxu0 0.0
    %1184 = vmatprep.subr.mxu0 0.0
    %1185 = vmatpush2.msra.mxu0 0.0
    %1186 = vmatprep.subr.mxu0 0.0
    %1187 = vmatpush2.msra.mxu0 0.0
    %1188 = vmatprep.subr.mxu0 0.0
    %1189 = vmatpush2.msra.mxu0 0.0
    %1190 = vmatprep.subr.mxu0 0.0
    %1191 = vmatpush2.msra.mxu0 0.0
    %1192 = vmatprep.mubr.f32.mxu0 0.0
    %1193 = vmatmul.mubr.f32.gmra.mxu0 %v1104
    %v1194 = vpop.f32.mrf.mxu0
    %v1195 = vadd.f32 %v1126, %v1194
    %v1196 = vpop.f32.mrf.mxu0
    %1197 = vdwg.mxu0
    %1198 = vmax.xlane.f32.xlu0 %v1195
    %v1199 = vpop.xlane.xlu0 %1198
    %v1200 = vsub.f32 %v1195, %v1199
    %v1201 = vmul.f32 %v1200, 1.442695
    %v1202 = vpow.pop %v1201
    %1203 = vadd.xlane.f32.xlu0 %v1202
    %v1204 = vpop.xlane.xlu0 %1203
    %v1205 = vlog2.pop %v1204
    %v1206 = vmul.f32 %v1205, 0.6931472
    %v1207 = vadd.f32 %v1199, %v1206
    %v1208 = vsub.f32 %v1195, %v1207
    %s1209 = scalar_lea.vmem %s5, 40
    %1210 = vst [vmem:[%s1209] sm:$0xff] %v1208
    %s1211 = scalar_lea.vmem %s0, 48
    %v1212 = vld [vmem:[%s1211] sm:$0xff]
    %v1213 = vld [vmem:[%s2] sm:$0xff]
    %v1214 = vld [vmem:[%s2 + $0x8] sm:$0xff]
    %v1215 = vld [vmem:[%s2 + $0x10] sm:$0xff]
    %v1216 = vld [vmem:[%s2 + $0x18] sm:$0xff]
    %v1217 = vld [vmem:[%s2 + $0x20] sm:$0xff]
    %v1218 = vld [vmem:[%s2 + $0x28] sm:$0xff]
    %v1219 = vld [vmem:[%s2 + $0x30] sm:$0xff]
    %v1220 = vld [vmem:[%s2 + $0x38] sm:$0xff]
    %v1221 = vld [vmem:[%s2 + $0x40] sm:$0xff]
    %v1222 = vld [vmem:[%s2 + $0x48] sm:$0xff]
    %v1223 = vld [vmem:[%s2 + $0x50] sm:$0xff]
    %v1224 = vld [vmem:[%s2 + $0x58] sm:$0xff]
    %v1225 = vld [vmem:[%s2 + $0x60] sm:$0xff]
    %v1226 = vld [vmem:[%s2 + $0x68] sm:$0xff]
    %v1227 = vld [vmem:[%s2 + $0x70] sm:$0xff]
    %v1228 = vld [vmem:[%s2 + $0x78] sm:$0xff]
    %1229 = vmatprep.subr.mxu0 0.0
    %1230 = vmatpush1.msra.mxu0 %v1228
    %1231 = vmatprep.subr.mxu0 0.0
    %1232 = vmatpush1.msra.mxu0 %v1227
    %1233 = vmatprep.subr.mxu0 0.0
    %1234 = vmatpush1.msra.mxu0 %v1226
    %1235 = vmatprep.subr.mxu0 0.0
    %1236 = vmatpush1.msra.mxu0 %v1225
    %1237 = vmatprep.subr.mxu0 0.0
    %1238 = vmatpush1.msra.mxu0 %v1224
    %1239 = vmatprep.subr.mxu0 0.0
    %1240 = vmatpush1.msra.mxu0 %v1223
    %1241 = vmatprep.subr.mxu0 0.0
    %1242 = vmatpush1.msra.mxu0 %v1222
    %1243 = vmatprep.subr.mxu0 0.0
    %1244 = vmatpush1.msra.mxu0 %v1221
    %1245 = vmatprep.subr.mxu0 0.0
    %1246 = vmatpush1.msra.mxu0 %v1220
    %1247 = vmatprep.subr.mxu0 0.0
    %1248 = vmatpush1.msra.mxu0 %v1219
    %1249 = vmatprep.subr.mxu0 0.0
    %1250 = vmatpush1.msra.mxu0 %v1218
    %1251 = vmatprep.subr.mxu0 0.0
    %1252 = vmatpush1.msra.mxu0 %v1217
    %1253 = vmatprep.subr.mxu0 0.0
    %1254 = vmatpush1.msra.mxu0 %v1216
    %1255 = vmatprep.subr.mxu0 0.0
    %1256 = vmatpush1.msra.mxu0 %v1215
    %1257 = vmatprep.subr.mxu0 0.0
    %1258 = vmatpush1.msra.mxu0 %v1214
    %1259 = vmatprep.subr.mxu0 0.0
    %1260 = vmatpush1.msra.mxu0 %v1213
    %1261 = vmatprep.subr.mxu0 0.0
    %1262 = vmatpush2.msra.mxu0 0.0
    %1263 = vmatprep.subr.mxu0 0.0
    %1264 = vmatpush2.msra.mxu0 0.0
    %1265 = vmatprep.subr.mxu0 0.0
    %1266 = vmatpush2.msra.mxu0 0.0
    %1267 = vmatprep.subr.mxu0 0.0
    %1268 = vmatpush2.msra.mxu0 0.0
    %1269 = vmatprep.subr.mxu0 0.0
    %1270 = vmatpush2.msra.mxu0 0.0
    %1271 = vmatprep.subr.mxu0 0.0
    %1272 = vmatpush2.msra.mxu0 0.0
    %1273 = vmatprep.subr.mxu0 0.0
    %1274 = vmatpush2.msra.mxu0 0.0
    %1275 = vmatprep.subr.mxu0 0.0
    %1276 = vmatpush2.msra.mxu0 0.0
    %1277 = vmatprep.subr.mxu0 0.0
    %1278 = vmatpush2.msra.mxu0 0.0
    %1279 = vmatprep.subr.mxu0 0.0
    %1280 = vmatpush2.msra.mxu0 0.0
    %1281 = vmatprep.subr.mxu0 0.0
    %1282 = vmatpush2.msra.mxu0 0.0
    %1283 = vmatprep.subr.mxu0 0.0
    %1284 = vmatpush2.msra.mxu0 0.0
    %1285 = vmatprep.subr.mxu0 0.0
    %1286 = vmatpush2.msra.mxu0 0.0
    %1287 = vmatprep.subr.mxu0 0.0
    %1288 = vmatpush2.msra.mxu0 0.0
    %1289 = vmatprep.subr.mxu0 0.0
    %1290 = vmatpush2.msra.mxu0 0.0
    %1291 = vmatprep.subr.mxu0 0.0
    %1292 = vmatpush2.msra.mxu0 0.0
    %1293 = vmatprep.mubr.f32.mxu0 0.0
    %1294 = vmatmul.mubr.f32.gmra.mxu0 %v1104
    %v1295 = vpop.f32.mrf.mxu0
    %v1296 = vadd.f32 0.0, %v1295
    %v1297 = vpop.f32.mrf.mxu0
    %1298 = vdwg.mxu0
    %v1299 = vadd.f32 %v1212, %v1296
    %v1300 = vld [vmem:[#allocation2] sm:$0xff]
    %v1301 = vld [vmem:[#allocation2 + $0x8] sm:$0xff]
    %v1302 = vld [vmem:[#allocation2 + $0x10] sm:$0xff]
    %v1303 = vld [vmem:[#allocation2 + $0x18] sm:$0xff]
    %v1304 = vld [vmem:[#allocation2 + $0x20] sm:$0xff]
    %v1305 = vld [vmem:[#allocation2 + $0x28] sm:$0xff]
    %v1306 = vld [vmem:[#allocation2 + $0x30] sm:$0xff]
    %v1307 = vld [vmem:[#allocation2 + $0x38] sm:$0xff]
    %v1308 = vld [vmem:[#allocation2 + $0x40] sm:$0xff]
    %v1309 = vld [vmem:[#allocation2 + $0x48] sm:$0xff]
    %v1310 = vld [vmem:[#allocation2 + $0x50] sm:$0xff]
    %v1311 = vld [vmem:[#allocation2 + $0x58] sm:$0xff]
    %v1312 = vld [vmem:[#allocation2 + $0x60] sm:$0xff]
    %v1313 = vld [vmem:[#allocation2 + $0x68] sm:$0xff]
    %v1314 = vld [vmem:[#allocation2 + $0x70] sm:$0xff]
    %v1315 = vld [vmem:[#allocation2 + $0x78] sm:$0xff]
    %v1316 = vld [vmem:[%s4] sm:$0x1]
    %v1318 = vlaneseq
    %v1319 = vshrl.u32 %v1318, 7
    %v1320 = vsub.s32 0, %v1319
    %v1321 = vrot.slane %v1316, %v1320
    %1323 = vmatprep.subr.mxu0 0.0
    %1324 = vmatpush1.msra.mxu0 %v1315
    %1325 = vmatprep.subr.mxu0 0.0
    %1326 = vmatpush1.msra.mxu0 %v1314
    %1327 = vmatprep.subr.mxu0 0.0
    %1328 = vmatpush1.msra.mxu0 %v1313
    %1329 = vmatprep.subr.mxu0 0.0
    %1330 = vmatpush1.msra.mxu0 %v1312
    %1331 = vmatprep.subr.mxu0 0.0
    %1332 = vmatpush1.msra.mxu0 %v1311
    %1333 = vmatprep.subr.mxu0 0.0
    %1334 = vmatpush1.msra.mxu0 %v1310
    %1335 = vmatprep.subr.mxu0 0.0
    %1336 = vmatpush1.msra.mxu0 %v1309
    %1337 = vmatprep.subr.mxu0 0.0
    %1338 = vmatpush1.msra.mxu0 %v1308
    %1339 = vmatprep.subr.mxu0 0.0
    %1340 = vmatpush1.msra.mxu0 %v1307
    %1341 = vmatprep.subr.mxu0 0.0
    %1342 = vmatpush1.msra.mxu0 %v1306
    %1343 = vmatprep.subr.mxu0 0.0
    %1344 = vmatpush1.msra.mxu0 %v1305
    %1345 = vmatprep.subr.mxu0 0.0
    %1346 = vmatpush1.msra.mxu0 %v1304
    %1347 = vmatprep.subr.mxu0 0.0
    %1348 = vmatpush1.msra.mxu0 %v1303
    %1349 = vmatprep.subr.mxu0 0.0
    %1350 = vmatpush1.msra.mxu0 %v1302
    %1351 = vmatprep.subr.mxu0 0.0
    %1352 = vmatpush1.msra.mxu0 %v1301
    %1353 = vmatprep.subr.mxu0 0.0
    %1354 = vmatpush1.msra.mxu0 %v1300
    %1355 = vmatprep.subr.mxu0 0.0
    %1356 = vmatpush2.msra.mxu0 0.0
    %1357 = vmatprep.subr.mxu0 0.0
    %1358 = vmatpush2.msra.mxu0 0.0
    %1359 = vmatprep.subr.mxu0 0.0
    %1360 = vmatpush2.msra.mxu0 0.0
    %1361 = vmatprep.subr.mxu0 0.0
    %1362 = vmatpush2.msra.mxu0 0.0
    %1363 = vmatprep.subr.mxu0 0.0
    %1364 = vmatpush2.msra.mxu0 0.0
    %1365 = vmatprep.subr.mxu0 0.0
    %1366 = vmatpush2.msra.mxu0 0.0
    %1367 = vmatprep.subr.mxu0 0.0
    %1368 = vmatpush2.msra.mxu0 0.0
    %1369 = vmatprep.subr.mxu0 0.0
    %1370 = vmatpush2.msra.mxu0 0.0
    %1371 = vmatprep.subr.mxu0 0.0
    %1372 = vmatpush2.msra.mxu0 0.0
    %1373 = vmatprep.subr.mxu0 0.0
    %1374 = vmatpush2.msra.mxu0 0.0
    %1375 = vmatprep.subr.mxu0 0.0
    %1376 = vmatpush2.msra.mxu0 0.0
    %1377 = vmatprep.subr.mxu0 0.0
    %1378 = vmatpush2.msra.mxu0 0.0
    %1379 = vmatprep.subr.mxu0 0.0
    %1380 = vmatpush2.msra.mxu0 0.0
    %1381 = vmatprep.subr.mxu0 0.0
    %1382 = vmatpush2.msra.mxu0 0.0
    %1383 = vmatprep.subr.mxu0 0.0
    %1384 = vmatpush2.msra.mxu0 0.0
    %1385 = vmatprep.subr.mxu0 0.0
    %1386 = vmatpush2.msra.mxu0 0.0
    %1387 = vmatprep.mubr.f32.mxu0 0.0
    %1388 = vmatmul.mubr.f32.gmra.mxu0 %v1299
    %v1389 = vpop.f32.mrf.mxu0
    %v1390 = vadd.f32 %v1321, %v1389
    %v1391 = vpop.f32.mrf.mxu0
    %1392 = vdwg.mxu0
    %1393 = vmax.xlane.f32.xlu0 %v1390
    %v1394 = vpop.xlane.xlu0 %1393
    %v1395 = vsub.f32 %v1390, %v1394
    %v1396 = vmul.f32 %v1395, 1.442695
    %v1397 = vpow.pop %v1396
    %1398 = vadd.xlane.f32.xlu0 %v1397
    %v1399 = vpop.xlane.xlu0 %1398
    %v1400 = vlog2.pop %v1399
    %v1401 = vmul.f32 %v1400, 0.6931472
    %v1402 = vadd.f32 %v1394, %v1401
    %v1403 = vsub.f32 %v1390, %v1402
    %s1404 = scalar_lea.vmem %s5, 48
    %1405 = vst [vmem:[%s1404] sm:$0xff] %v1403
    %s1406 = scalar_lea.vmem %s0, 56
    %v1407 = vld [vmem:[%s1406] sm:$0xff]
    %v1408 = vld [vmem:[%s2] sm:$0xff]
    %v1409 = vld [vmem:[%s2 + $0x8] sm:$0xff]
    %v1410 = vld [vmem:[%s2 + $0x10] sm:$0xff]
    %v1411 = vld [vmem:[%s2 + $0x18] sm:$0xff]
    %v1412 = vld [vmem:[%s2 + $0x20] sm:$0xff]
    %v1413 = vld [vmem:[%s2 + $0x28] sm:$0xff]
    %v1414 = vld [vmem:[%s2 + $0x30] sm:$0xff]
    %v1415 = vld [vmem:[%s2 + $0x38] sm:$0xff]
    %v1416 = vld [vmem:[%s2 + $0x40] sm:$0xff]
    %v1417 = vld [vmem:[%s2 + $0x48] sm:$0xff]
    %v1418 = vld [vmem:[%s2 + $0x50] sm:$0xff]
    %v1419 = vld [vmem:[%s2 + $0x58] sm:$0xff]
    %v1420 = vld [vmem:[%s2 + $0x60] sm:$0xff]
    %v1421 = vld [vmem:[%s2 + $0x68] sm:$0xff]
    %v1422 = vld [vmem:[%s2 + $0x70] sm:$0xff]
    %v1423 = vld [vmem:[%s2 + $0x78] sm:$0xff]
    %1424 = vmatprep.subr.mxu0 0.0
    %1425 = vmatpush1.msra.mxu0 %v1423
    %1426 = vmatprep.subr.mxu0 0.0
    %1427 = vmatpush1.msra.mxu0 %v1422
    %1428 = vmatprep.subr.mxu0 0.0
    %1429 = vmatpush1.msra.mxu0 %v1421
    %1430 = vmatprep.subr.mxu0 0.0
    %1431 = vmatpush1.msra.mxu0 %v1420
    %1432 = vmatprep.subr.mxu0 0.0
    %1433 = vmatpush1.msra.mxu0 %v1419
    %1434 = vmatprep.subr.mxu0 0.0
    %1435 = vmatpush1.msra.mxu0 %v1418
    %1436 = vmatprep.subr.mxu0 0.0
    %1437 = vmatpush1.msra.mxu0 %v1417
    %1438 = vmatprep.subr.mxu0 0.0
    %1439 = vmatpush1.msra.mxu0 %v1416
    %1440 = vmatprep.subr.mxu0 0.0
    %1441 = vmatpush1.msra.mxu0 %v1415
    %1442 = vmatprep.subr.mxu0 0.0
    %1443 = vmatpush1.msra.mxu0 %v1414
    %1444 = vmatprep.subr.mxu0 0.0
    %1445 = vmatpush1.msra.mxu0 %v1413
    %1446 = vmatprep.subr.mxu0 0.0
    %1447 = vmatpush1.msra.mxu0 %v1412
    %1448 = vmatprep.subr.mxu0 0.0
    %1449 = vmatpush1.msra.mxu0 %v1411
    %1450 = vmatprep.subr.mxu0 0.0
    %1451 = vmatpush1.msra.mxu0 %v1410
    %1452 = vmatprep.subr.mxu0 0.0
    %1453 = vmatpush1.msra.mxu0 %v1409
    %1454 = vmatprep.subr.mxu0 0.0
    %1455 = vmatpush1.msra.mxu0 %v1408
    %1456 = vmatprep.subr.mxu0 0.0
    %1457 = vmatpush2.msra.mxu0 0.0
    %1458 = vmatprep.subr.mxu0 0.0
    %1459 = vmatpush2.msra.mxu0 0.0
    %1460 = vmatprep.subr.mxu0 0.0
    %1461 = vmatpush2.msra.mxu0 0.0
    %1462 = vmatprep.subr.mxu0 0.0
    %1463 = vmatpush2.msra.mxu0 0.0
    %1464 = vmatprep.subr.mxu0 0.0
    %1465 = vmatpush2.msra.mxu0 0.0
    %1466 = vmatprep.subr.mxu0 0.0
    %1467 = vmatpush2.msra.mxu0 0.0
    %1468 = vmatprep.subr.mxu0 0.0
    %1469 = vmatpush2.msra.mxu0 0.0
    %1470 = vmatprep.subr.mxu0 0.0
    %1471 = vmatpush2.msra.mxu0 0.0
    %1472 = vmatprep.subr.mxu0 0.0
    %1473 = vmatpush2.msra.mxu0 0.0
    %1474 = vmatprep.subr.mxu0 0.0
    %1475 = vmatpush2.msra.mxu0 0.0
    %1476 = vmatprep.subr.mxu0 0.0
    %1477 = vmatpush2.msra.mxu0 0.0
    %1478 = vmatprep.subr.mxu0 0.0
    %1479 = vmatpush2.msra.mxu0 0.0
    %1480 = vmatprep.subr.mxu0 0.0
    %1481 = vmatpush2.msra.mxu0 0.0
    %1482 = vmatprep.subr.mxu0 0.0
    %1483 = vmatpush2.msra.mxu0 0.0
    %1484 = vmatprep.subr.mxu0 0.0
    %1485 = vmatpush2.msra.mxu0 0.0
    %1486 = vmatprep.subr.mxu0 0.0
    %1487 = vmatpush2.msra.mxu0 0.0
    %1488 = vmatprep.mubr.f32.mxu0 0.0
    %1489 = vmatmul.mubr.f32.gmra.mxu0 %v1299
    %v1490 = vpop.f32.mrf.mxu0
    %v1491 = vadd.f32 0.0, %v1490
    %v1492 = vpop.f32.mrf.mxu0
    %1493 = vdwg.mxu0
    %v1494 = vadd.f32 %v1407, %v1491
    %v1495 = vld [vmem:[#allocation2] sm:$0xff]
    %v1496 = vld [vmem:[#allocation2 + $0x8] sm:$0xff]
    %v1497 = vld [vmem:[#allocation2 + $0x10] sm:$0xff]
    %v1498 = vld [vmem:[#allocation2 + $0x18] sm:$0xff]
    %v1499 = vld [vmem:[#allocation2 + $0x20] sm:$0xff]
    %v1500 = vld [vmem:[#allocation2 + $0x28] sm:$0xff]
    %v1501 = vld [vmem:[#allocation2 + $0x30] sm:$0xff]
    %v1502 = vld [vmem:[#allocation2 + $0x38] sm:$0xff]
    %v1503 = vld [vmem:[#allocation2 + $0x40] sm:$0xff]
    %v1504 = vld [vmem:[#allocation2 + $0x48] sm:$0xff]
    %v1505 = vld [vmem:[#allocation2 + $0x50] sm:$0xff]
    %v1506 = vld [vmem:[#allocation2 + $0x58] sm:$0xff]
    %v1507 = vld [vmem:[#allocation2 + $0x60] sm:$0xff]
    %v1508 = vld [vmem:[#allocation2 + $0x68] sm:$0xff]
    %v1509 = vld [vmem:[#allocation2 + $0x70] sm:$0xff]
    %v1510 = vld [vmem:[#allocation2 + $0x78] sm:$0xff]
    %v1511 = vld [vmem:[%s4] sm:$0x1]
    %v1513 = vlaneseq
    %v1514 = vshrl.u32 %v1513, 7
    %v1515 = vsub.s32 0, %v1514
    %v1516 = vrot.slane %v1511, %v1515
    %1518 = vmatprep.subr.mxu0 0.0
    %1519 = vmatpush1.msra.mxu0 %v1510
    %1520 = vmatprep.subr.mxu0 0.0
    %1521 = vmatpush1.msra.mxu0 %v1509
    %1522 = vmatprep.subr.mxu0 0.0
    %1523 = vmatpush1.msra.mxu0 %v1508
    %1524 = vmatprep.subr.mxu0 0.0
    %1525 = vmatpush1.msra.mxu0 %v1507
    %1526 = vmatprep.subr.mxu0 0.0
    %1527 = vmatpush1.msra.mxu0 %v1506
    %1528 = vmatprep.subr.mxu0 0.0
    %1529 = vmatpush1.msra.mxu0 %v1505
    %1530 = vmatprep.subr.mxu0 0.0
    %1531 = vmatpush1.msra.mxu0 %v1504
    %1532 = vmatprep.subr.mxu0 0.0
    %1533 = vmatpush1.msra.mxu0 %v1503
    %1534 = vmatprep.subr.mxu0 0.0
    %1535 = vmatpush1.msra.mxu0 %v1502
    %1536 = vmatprep.subr.mxu0 0.0
    %1537 = vmatpush1.msra.mxu0 %v1501
    %1538 = vmatprep.subr.mxu0 0.0
    %1539 = vmatpush1.msra.mxu0 %v1500
    %1540 = vmatprep.subr.mxu0 0.0
    %1541 = vmatpush1.msra.mxu0 %v1499
    %1542 = vmatprep.subr.mxu0 0.0
    %1543 = vmatpush1.msra.mxu0 %v1498
    %1544 = vmatprep.subr.mxu0 0.0
    %1545 = vmatpush1.msra.mxu0 %v1497
    %1546 = vmatprep.subr.mxu0 0.0
    %1547 = vmatpush1.msra.mxu0 %v1496
    %1548 = vmatprep.subr.mxu0 0.0
    %1549 = vmatpush1.msra.mxu0 %v1495
    %1550 = vmatprep.subr.mxu0 0.0
    %1551 = vmatpush2.msra.mxu0 0.0
    %1552 = vmatprep.subr.mxu0 0.0
    %1553 = vmatpush2.msra.mxu0 0.0
    %1554 = vmatprep.subr.mxu0 0.0
    %1555 = vmatpush2.msra.mxu0 0.0
    %1556 = vmatprep.subr.mxu0 0.0
    %1557 = vmatpush2.msra.mxu0 0.0
    %1558 = vmatprep.subr.mxu0 0.0
    %1559 = vmatpush2.msra.mxu0 0.0
    %1560 = vmatprep.subr.mxu0 0.0
    %1561 = vmatpush2.msra.mxu0 0.0
    %1562 = vmatprep.subr.mxu0 0.0
    %1563 = vmatpush2.msra.mxu0 0.0
    %1564 = vmatprep.subr.mxu0 0.0
    %1565 = vmatpush2.msra.mxu0 0.0
    %1566 = vmatprep.subr.mxu0 0.0
    %1567 = vmatpush2.msra.mxu0 0.0
    %1568 = vmatprep.subr.mxu0 0.0
    %1569 = vmatpush2.msra.mxu0 0.0
    %1570 = vmatprep.subr.mxu0 0.0
    %1571 = vmatpush2.msra.mxu0 0.0
    %1572 = vmatprep.subr.mxu0 0.0
    %1573 = vmatpush2.msra.mxu0 0.0
    %1574 = vmatprep.subr.mxu0 0.0
    %1575 = vmatpush2.msra.mxu0 0.0
    %1576 = vmatprep.subr.mxu0 0.0
    %1577 = vmatpush2.msra.mxu0 0.0
    %1578 = vmatprep.subr.mxu0 0.0
    %1579 = vmatpush2.msra.mxu0 0.0
    %1580 = vmatprep.subr.mxu0 0.0
    %1581 = vmatpush2.msra.mxu0 0.0
    %1582 = vmatprep.mubr.f32.mxu0 0.0
    %1583 = vmatmul.mubr.f32.gmra.mxu0 %v1494
    %v1584 = vpop.f32.mrf.mxu0
    %v1585 = vadd.f32 %v1516, %v1584
    %v1586 = vpop.f32.mrf.mxu0
    %1587 = vdwg.mxu0
    %1588 = vmax.xlane.f32.xlu0 %v1585
    %v1589 = vpop.xlane.xlu0 %1588
    %v1590 = vsub.f32 %v1585, %v1589
    %v1591 = vmul.f32 %v1590, 1.442695
    %v1592 = vpow.pop %v1591
    %1593 = vadd.xlane.f32.xlu0 %v1592
    %v1594 = vpop.xlane.xlu0 %1593
    %v1595 = vlog2.pop %v1594
    %v1596 = vmul.f32 %v1595, 0.6931472
    %v1597 = vadd.f32 %v1589, %v1596
    %v1598 = vsub.f32 %v1585, %v1597
    %s1599 = scalar_lea.vmem %s5, 56
    %1600 = vst [vmem:[%s1599] sm:$0xff] %v1598
    %1601 = vst [vmem:[%s6] sm:$0xff] %v1494
    // Predicated region
    $region30: #{rnn_forward.1} parent=1 // pred_check
      _
    $region31: #{rnn_forward.1} parent=1 // pred_check_branch
      %1603 = sbr.rel (0) target = $region33
    $region32: #{rnn_forward.1} parent=1 // pred_region
      _
    $region33: #{rnn_forward.1} parent=1 // pred_fallthru
      _
    // Predicated region
    $region34: #{rnn_forward.1} parent=1 // pred_check
      _
    $region35: #{rnn_forward.1} parent=1 // pred_check_branch
      %1605 = sbr.rel (0) target = $region37
    $region36: #{rnn_forward.1} parent=1 // pred_region
      _
    $region37: #{rnn_forward.1} parent=1 // pred_fallthru
      _
    // Predicated region
    $region38: #{rnn_forward.1} parent=1 // pred_check
      _
    $region39: #{rnn_forward.1} parent=1 // pred_check_branch
      %1607 = sbr.rel (0) target = $region41
    $region40: #{rnn_forward.1} parent=1 // pred_region
      _
    $region41: #{rnn_forward.1} parent=1 // pred_fallthru
      _
    // Predicated region
    $region42: #{rnn_forward.1} parent=1 // pred_check
      _
    $region43: #{rnn_forward.1} parent=1 // pred_check_branch
      %1609 = sbr.rel (0) target = $region45
    $region44: #{rnn_forward.1} parent=1 // pred_region
      _
    $region45: #{rnn_forward.1} parent=1 // pred_fallthru
      _
    %1610 = vsyncpa [#allocation3], 1

</llo_original>
